<compile_context>
chip_gen: v7x
topology: tpu7x:2x2x1
jax: 0.10.0
libtpu: 0.0.40
codegen_flags: <defaults>
</compile_context>

<pallas_src>
import jax
import jax.numpy as jnp
from jax import lax
from jax.experimental import pallas as pl
from jax.experimental.pallas import tpu as pltpu

# ---- "lib" constants (synthetic, deterministic) ----
VOCAB = 50            # len(lib.ws)
EMBED = 100
HIDDEN_SIZE = 32      # lib.HIDDEN_SIZE
NUM_LAYER = 1         # lib.NUM_LAYER (forward uses only last layer's fw/bw h_n)
FC1_DIM = 20
N_CLASS = 2
# lib.BIDIRECTIONAL = True; lib.DROPOUT is irrelevant at inference.


def _bilstm_mlp_kernel(ids_ref,                               # [T*B, 1] int32 (time-major: row = t*B + b)
                       emb_ref,                               # [V, E]  f32
                       wih_fw_ref, whh_fw_ref, b_fw_ref,      # [E,4H], [H,4H], [1,4H]
                       wih_bw_ref, whh_bw_ref, b_bw_ref,      # [E,4H], [H,4H], [1,4H]
                       w1_ref, b1_ref,                        # [2H,20], [1,20]
                       w2_ref, b2_ref,                        # [20,2],  [1,2]
                       out_ref):                              # [B, 2] f32
    TB = ids_ref.shape[0]
    B = out_ref.shape[0]
    T = TB // B
    H = whh_fw_ref.shape[0]
    V, _ = emb_ref.shape

    # ---------- one-shot (non-recurrent) MXU work ----------
    # Embedding gather as a one-hot matmul: robust in-kernel gather on the MXU.
    ids = ids_ref[...]                                              # [T*B, 1] int32
    vocab_iota = lax.broadcasted_iota(jnp.int32, (TB, V), 1)
    onehot = (ids == vocab_iota).astype(jnp.float32)                # [T*B, V]
    x_emb = jnp.dot(onehot, emb_ref[...],
                    preferred_element_type=jnp.float32)             # [T*B, E]

    # Hoisted input projections for both directions; biases folded in once.
    # NOTE: PyTorch LSTM has b_ih and b_hh per gate set; here a single fused
    # bias is used (sum them when porting real PyTorch weights).
    gx_fw = jnp.dot(x_emb, wih_fw_ref[...],
                    preferred_element_type=jnp.float32) + b_fw_ref[...]   # [T*B, 4H]
    gx_bw = jnp.dot(x_emb, wih_bw_ref[...],
                    preferred_element_type=jnp.float32) + b_bw_ref[...]   # [T*B, 4H]

    whh_fw = whh_fw_ref[...]
    whh_bw = whh_bw_ref[...]

    # Lane-dense activation mask (hoisted; gate order [i | f | g | o], g -> tanh).
    lane = lax.broadcasted_iota(jnp.int32, (B, 4 * H), 1)
    is_g_lane = (lane >= 2 * H) & (lane < 3 * H)

    def cell_update(gates, c):
        # Apply sigmoid/tanh over the full 128-lane gate slab, select by lane.
        sg = jax.nn.sigmoid(gates)
        th = jnp.tanh(gates)
        act = jnp.where(is_g_lane, th, sg)
        i = act[:, 0 * H:1 * H]
        f = act[:, 1 * H:2 * H]
        g = act[:, 2 * H:3 * H]
        o = act[:, 3 * H:4 * H]
        c_new = f * c + i * g
        h_new = o * jnp.tanh(c_new)
        return h_new, c_new

    h_fw = jnp.zeros((B, H), jnp.float32)
    c_fw = jnp.zeros((B, H), jnp.float32)
    h_bw = jnp.zeros((B, H), jnp.float32)
    c_bw = jnp.zeros((B, H), jnp.float32)

    # ---------- fused, fully-unrolled bidirectional recurrence ----------
    # Only the tiny K=H recurrent matmul per direction sits on the serial path.
    for t in range(T):
        tb = T - 1 - t  # reversed time for the backward direction
        g_fw = (jnp.dot(h_fw, whh_fw, preferred_element_type=jnp.float32)
                + gx_fw[t * B:(t + 1) * B, :])
        g_bw = (jnp.dot(h_bw, whh_bw, preferred_element_type=jnp.float32)
                + gx_bw[tb * B:(tb + 1) * B, :])
        h_fw, c_fw = cell_update(g_fw, c_fw)
        h_bw, c_bw = cell_update(g_bw, c_bw)

    # h_fw == h_n[-2] (forward last), h_bw == h_n[-1] (backward last), concat order
    # matches torch.cat([output_fw, output_bw], dim=-1).
    feat = jnp.concatenate([h_fw, h_bw], axis=1)                    # [B, 2H]

    # ---------- MLP head + log_softmax ----------
    z1 = jnp.dot(feat, w1_ref[...], preferred_element_type=jnp.float32) + b1_ref[...]
    z1 = jnp.maximum(z1, 0.0)                                       # ReLU
    z2 = jnp.dot(z1, w2_ref[...], preferred_element_type=jnp.float32) + b2_ref[...]

    m = jnp.max(z2, axis=-1, keepdims=True)
    s = z2 - m
    lse = jnp.log(jnp.sum(jnp.exp(s), axis=-1, keepdims=True))
    out_ref[...] = s - lse


def init_params(key):
    H = HIDDEN_SIZE
    ks = jax.random.split(key, 12)
    scale = 1.0 / jnp.sqrt(H)
    p = {
        "emb":    jax.random.normal(ks[0], (VOCAB, EMBED), jnp.float32) * 0.1,
        # weights stored transposed vs PyTorch: (in_dim, out_dim)
        "wih_fw": jax.random.uniform(ks[1], (EMBED, 4 * H), jnp.float32, -scale, scale),
        "whh_fw": jax.random.uniform(ks[2], (H, 4 * H), jnp.float32, -scale, scale),
        "b_fw":   jax.random.uniform(ks[3], (1, 4 * H), jnp.float32, -scale, scale),
        "wih_bw": jax.random.uniform(ks[4], (EMBED, 4 * H), jnp.float32, -scale, scale),
        "whh_bw": jax.random.uniform(ks[5], (H, 4 * H), jnp.float32, -scale, scale),
        "b_bw":   jax.random.uniform(ks[6], (1, 4 * H), jnp.float32, -scale, scale),
        "w1":     jax.random.uniform(ks[7], (2 * H, FC1_DIM), jnp.float32, -0.1, 0.1),
        "b1":     jax.random.uniform(ks[8], (1, FC1_DIM), jnp.float32, -0.1, 0.1),
        "w2":     jax.random.uniform(ks[9], (FC1_DIM, N_CLASS), jnp.float32, -0.1, 0.1),
        "b2":     jax.random.uniform(ks[10], (1, N_CLASS), jnp.float32, -0.1, 0.1),
    }
    return p


def _forward_impl(x_ids, params):
    """x_ids: [B, T] int32 -> log-probs [B, 2] float32"""
    B, T = x_ids.shape
    # Only the tiny int32 id tensor (T*B ints) is rearranged outside the kernel;
    # embedding gather + all f32 work happens in-kernel (no x_emb HBM round-trip).
    ids_tm = jnp.transpose(x_ids).reshape(T * B, 1).astype(jnp.int32)  # time-major

    args = (ids_tm, params["emb"],
            params["wih_fw"], params["whh_fw"], params["b_fw"],
            params["wih_bw"], params["whh_bw"], params["b_bw"],
            params["w1"], params["b1"],
            params["w2"], params["b2"])

    vmem_spec = pl.BlockSpec(memory_space=pltpu.MemorySpace.VMEM)
    out = pl.pallas_call(
        _bilstm_mlp_kernel,
        out_shape=jax.ShapeDtypeStruct((B, N_CLASS), jnp.float32),
        in_specs=[vmem_spec] * len(args),
        out_specs=vmem_spec,
    )(*args)
    return out
    # TODO(synk): if batch size grows, add a grid over batch with
    # dimension_semantics=("parallel",) so v7x's 2 TensorCores each take a shard.


my_model_forward = jax.jit(_forward_impl)


if __name__ == "__main__":
    key = jax.random.PRNGKey(0)
    pkey, xkey = jax.random.split(key)
    params = init_params(pkey)

    B, T = 2, 8
    x_ids = jax.random.randint(xkey, (B, T), 0, VOCAB, dtype=jnp.int32)

    out = my_model_forward(x_ids, params)
    out = jax.block_until_ready(out)
    assert out.shape == (B, N_CLASS) and out.dtype == jnp.float32
    # rows of log_softmax must exp-sum to 1
    assert bool(jnp.allclose(jnp.sum(jnp.exp(out), axis=-1), 1.0, atol=1e-5))
    print("KERNEL_OK")
</pallas_src>

<mosaic_0001>
module attributes {stable_mosaic.version = 11 : i64} {
  func.func @_bilstm_mlp_kernel(%arg0: memref<16x1xi32, #tpu.memory_space<vmem>>, %arg1: memref<50x100xf32, #tpu.memory_space<vmem>>, %arg2: memref<100x128xf32, #tpu.memory_space<vmem>>, %arg3: memref<32x128xf32, #tpu.memory_space<vmem>>, %arg4: memref<1x128xf32, #tpu.memory_space<vmem>>, %arg5: memref<100x128xf32, #tpu.memory_space<vmem>>, %arg6: memref<32x128xf32, #tpu.memory_space<vmem>>, %arg7: memref<1x128xf32, #tpu.memory_space<vmem>>, %arg8: memref<64x20xf32, #tpu.memory_space<vmem>>, %arg9: memref<1x20xf32, #tpu.memory_space<vmem>>, %arg10: memref<20x2xf32, #tpu.memory_space<vmem>>, %arg11: memref<1x2xf32, #tpu.memory_space<vmem>>, %arg12: memref<2x2xf32, #tpu.memory_space<vmem>>) attributes {dimension_semantics = [], scalar_prefetch = 0 : i64, scratch_operands = 0 : i64, tpu.core_type = #tpu.core_type<tc>} {
    %c0 = arith.constant 0 : index
    %c0_0 = arith.constant 0 : index
    %0 = vector.load %arg0[%c0, %c0_0] : memref<16x1xi32, #tpu.memory_space<vmem>>, vector<16x1xi32>
    %1 = tpu.iota {dimensions = array<i32: 1>} : vector<16x50xi32>
    %2 = vector.broadcast %0 : vector<16x1xi32> to vector<16x50xi32>
    %3 = arith.cmpi eq, %2, %1 : vector<16x50xi32>
    %4 = arith.extui %3 : vector<16x50xi1> to vector<16x50xi32>
    %5 = arith.sitofp %4 : vector<16x50xi32> to vector<16x50xf32>
    %c0_1 = arith.constant 0 : index
    %c0_2 = arith.constant 0 : index
    %6 = vector.load %arg1[%c0_1, %c0_2] : memref<50x100xf32, #tpu.memory_space<vmem>>, vector<50x100xf32>
    %cst = arith.constant dense<0.000000e+00> : vector<16x100xf32>
    %7 = tpu.matmul %5, %6, %cst {dimension_numbers = #tpu.dot_dimension_numbers<[1], [0], [0], [1], [0, 0, 1, 1], [], []>} : vector<16x50xf32>, vector<50x100xf32>, vector<16x100xf32> -> vector<16x100xf32>
    %c0_3 = arith.constant 0 : index
    %c0_4 = arith.constant 0 : index
    %8 = vector.load %arg2[%c0_3, %c0_4] : memref<100x128xf32, #tpu.memory_space<vmem>>, vector<100x128xf32>
    %cst_5 = arith.constant dense<0.000000e+00> : vector<16x128xf32>
    %9 = tpu.matmul %7, %8, %cst_5 {dimension_numbers = #tpu.dot_dimension_numbers<[1], [0], [0], [1], [0, 0, 1, 1], [], []>} : vector<16x100xf32>, vector<100x128xf32>, vector<16x128xf32> -> vector<16x128xf32>
    %c0_6 = arith.constant 0 : index
    %c0_7 = arith.constant 0 : index
    %10 = vector.load %arg4[%c0_6, %c0_7] : memref<1x128xf32, #tpu.memory_space<vmem>>, vector<1x128xf32>
    %11 = vector.broadcast %10 : vector<1x128xf32> to vector<16x128xf32>
    %12 = arith.addf %9, %11 : vector<16x128xf32>
    %c0_8 = arith.constant 0 : index
    %c0_9 = arith.constant 0 : index
    %13 = vector.load %arg5[%c0_8, %c0_9] : memref<100x128xf32, #tpu.memory_space<vmem>>, vector<100x128xf32>
    %cst_10 = arith.constant dense<0.000000e+00> : vector<16x128xf32>
    %14 = tpu.matmul %7, %13, %cst_10 {dimension_numbers = #tpu.dot_dimension_numbers<[1], [0], [0], [1], [0, 0, 1, 1], [], []>} : vector<16x100xf32>, vector<100x128xf32>, vector<16x128xf32> -> vector<16x128xf32>
    %c0_11 = arith.constant 0 : index
    %c0_12 = arith.constant 0 : index
    %15 = vector.load %arg7[%c0_11, %c0_12] : memref<1x128xf32, #tpu.memory_space<vmem>>, vector<1x128xf32>
    %16 = vector.broadcast %15 : vector<1x128xf32> to vector<16x128xf32>
    %17 = arith.addf %14, %16 : vector<16x128xf32>
    %c0_13 = arith.constant 0 : index
    %c0_14 = arith.constant 0 : index
    %18 = vector.load %arg3[%c0_13, %c0_14] : memref<32x128xf32, #tpu.memory_space<vmem>>, vector<32x128xf32>
    %c0_15 = arith.constant 0 : index
    %c0_16 = arith.constant 0 : index
    %19 = vector.load %arg6[%c0_15, %c0_16] : memref<32x128xf32, #tpu.memory_space<vmem>>, vector<32x128xf32>
    %20 = tpu.iota {dimensions = array<i32: 1>} : vector<2x128xi32>
    %c64_i32 = arith.constant 64 : i32
    %21 = vector.broadcast %c64_i32 : i32 to vector<2x128xi32>
    %22 = arith.cmpi sge, %20, %21 : vector<2x128xi32>
    %c96_i32 = arith.constant 96 : i32
    %23 = vector.broadcast %c96_i32 : i32 to vector<2x128xi32>
    %24 = arith.cmpi slt, %20, %23 : vector<2x128xi32>
    %25 = arith.andi %22, %24 : vector<2x128xi1>
    %cst_17 = arith.constant 0.000000e+00 : f32
    %26 = vector.broadcast %cst_17 : f32 to vector<2x32xf32>
    %cst_18 = arith.constant 0.000000e+00 : f32
    %27 = vector.broadcast %cst_18 : f32 to vector<2x32xf32>
    %cst_19 = arith.constant 0.000000e+00 : f32
    %28 = vector.broadcast %cst_19 : f32 to vector<2x32xf32>
    %cst_20 = arith.constant 0.000000e+00 : f32
    %29 = vector.broadcast %cst_20 : f32 to vector<2x32xf32>
    %cst_21 = arith.constant dense<0.000000e+00> : vector<2x128xf32>
    %30 = tpu.matmul %26, %18, %cst_21 {dimension_numbers = #tpu.dot_dimension_numbers<[1], [0], [0], [1], [0, 0, 1, 1], [], []>} : vector<2x32xf32>, vector<32x128xf32>, vector<2x128xf32> -> vector<2x128xf32>
    %31 = vector.extract_strided_slice %12 {offsets = [0, 0], sizes = [2, 128], strides = [1, 1]} : vector<16x128xf32> to vector<2x128xf32>
    %32 = arith.addf %30, %31 : vector<2x128xf32>
    %cst_22 = arith.constant dense<0.000000e+00> : vector<2x128xf32>
    %33 = tpu.matmul %28, %19, %cst_22 {dimension_numbers = #tpu.dot_dimension_numbers<[1], [0], [0], [1], [0, 0, 1, 1], [], []>} : vector<2x32xf32>, vector<32x128xf32>, vector<2x128xf32> -> vector<2x128xf32>
    %34 = vector.extract_strided_slice %17 {offsets = [14, 0], sizes = [2, 128], strides = [1, 1]} : vector<16x128xf32> to vector<2x128xf32>
    %35 = arith.addf %33, %34 : vector<2x128xf32>
    %36 = arith.negf %32 : vector<2x128xf32>
    %37 = math.exp %36 : vector<2x128xf32>
    %cst_23 = arith.constant 1.000000e+00 : f32
    %38 = vector.broadcast %cst_23 : f32 to vector<2x128xf32>
    %39 = arith.addf %38, %37 : vector<2x128xf32>
    %40 = arith.divf %38, %39 : vector<2x128xf32>
    %41 = math.tanh %32 : vector<2x128xf32>
    %42 = arith.select %25, %41, %40 : vector<2x128xi1>, vector<2x128xf32>
    %43 = vector.extract_strided_slice %42 {offsets = [0, 0], sizes = [2, 32], strides = [1, 1]} : vector<2x128xf32> to vector<2x32xf32>
    %44 = vector.extract_strided_slice %42 {offsets = [0, 32], sizes = [2, 32], strides = [1, 1]} : vector<2x128xf32> to vector<2x32xf32>
    %45 = vector.extract_strided_slice %42 {offsets = [0, 64], sizes = [2, 32], strides = [1, 1]} : vector<2x128xf32> to vector<2x32xf32>
    %46 = vector.extract_strided_slice %42 {offsets = [0, 96], sizes = [2, 32], strides = [1, 1]} : vector<2x128xf32> to vector<2x32xf32>
    %47 = arith.mulf %44, %27 : vector<2x32xf32>
    %48 = arith.mulf %43, %45 : vector<2x32xf32>
    %49 = arith.addf %47, %48 : vector<2x32xf32>
    %50 = math.tanh %49 : vector<2x32xf32>
    %51 = arith.mulf %46, %50 : vector<2x32xf32>
    %52 = arith.negf %35 : vector<2x128xf32>
    %53 = math.exp %52 : vector<2x128xf32>
    %cst_24 = arith.constant 1.000000e+00 : f32
    %54 = vector.broadcast %cst_24 : f32 to vector<2x128xf32>
    %55 = arith.addf %54, %53 : vector<2x128xf32>
    %56 = arith.divf %54, %55 : vector<2x128xf32>
    %57 = math.tanh %35 : vector<2x128xf32>
    %58 = arith.select %25, %57, %56 : vector<2x128xi1>, vector<2x128xf32>
    %59 = vector.extract_strided_slice %58 {offsets = [0, 0], sizes = [2, 32], strides = [1, 1]} : vector<2x128xf32> to vector<2x32xf32>
    %60 = vector.extract_strided_slice %58 {offsets = [0, 32], sizes = [2, 32], strides = [1, 1]} : vector<2x128xf32> to vector<2x32xf32>
    %61 = vector.extract_strided_slice %58 {offsets = [0, 64], sizes = [2, 32], strides = [1, 1]} : vector<2x128xf32> to vector<2x32xf32>
    %62 = vector.extract_strided_slice %58 {offsets = [0, 96], sizes = [2, 32], strides = [1, 1]} : vector<2x128xf32> to vector<2x32xf32>
    %63 = arith.mulf %60, %29 : vector<2x32xf32>
    %64 = arith.mulf %59, %61 : vector<2x32xf32>
    %65 = arith.addf %63, %64 : vector<2x32xf32>
    %66 = math.tanh %65 : vector<2x32xf32>
    %67 = arith.mulf %62, %66 : vector<2x32xf32>
    %cst_25 = arith.constant dense<0.000000e+00> : vector<2x128xf32>
    %68 = tpu.matmul %51, %18, %cst_25 {dimension_numbers = #tpu.dot_dimension_numbers<[1], [0], [0], [1], [0, 0, 1, 1], [], []>} : vector<2x32xf32>, vector<32x128xf32>, vector<2x128xf32> -> vector<2x128xf32>
    %69 = vector.extract_strided_slice %12 {offsets = [2, 0], sizes = [2, 128], strides = [1, 1]} : vector<16x128xf32> to vector<2x128xf32>
    %70 = arith.addf %68, %69 : vector<2x128xf32>
    %cst_26 = arith.constant dense<0.000000e+00> : vector<2x128xf32>
    %71 = tpu.matmul %67, %19, %cst_26 {dimension_numbers = #tpu.dot_dimension_numbers<[1], [0], [0], [1], [0, 0, 1, 1], [], []>} : vector<2x32xf32>, vector<32x128xf32>, vector<2x128xf32> -> vector<2x128xf32>
    %72 = vector.extract_strided_slice %17 {offsets = [12, 0], sizes = [2, 128], strides = [1, 1]} : vector<16x128xf32> to vector<2x128xf32>
    %73 = arith.addf %71, %72 : vector<2x128xf32>
    %74 = arith.negf %70 : vector<2x128xf32>
    %75 = math.exp %74 : vector<2x128xf32>
    %cst_27 = arith.constant 1.000000e+00 : f32
    %76 = vector.broadcast %cst_27 : f32 to vector<2x128xf32>
    %77 = arith.addf %76, %75 : vector<2x128xf32>
    %78 = arith.divf %76, %77 : vector<2x128xf32>
    %79 = math.tanh %70 : vector<2x128xf32>
    %80 = arith.select %25, %79, %78 : vector<2x128xi1>, vector<2x128xf32>
    %81 = vector.extract_strided_slice %80 {offsets = [0, 0], sizes = [2, 32], strides = [1, 1]} : vector<2x128xf32> to vector<2x32xf32>
    %82 = vector.extract_strided_slice %80 {offsets = [0, 32], sizes = [2, 32], strides = [1, 1]} : vector<2x128xf32> to vector<2x32xf32>
    %83 = vector.extract_strided_slice %80 {offsets = [0, 64], sizes = [2, 32], strides = [1, 1]} : vector<2x128xf32> to vector<2x32xf32>
    %84 = vector.extract_strided_slice %80 {offsets = [0, 96], sizes = [2, 32], strides = [1, 1]} : vector<2x128xf32> to vector<2x32xf32>
    %85 = arith.mulf %82, %49 : vector<2x32xf32>
    %86 = arith.mulf %81, %83 : vector<2x32xf32>
    %87 = arith.addf %85, %86 : vector<2x32xf32>
    %88 = math.tanh %87 : vector<2x32xf32>
    %89 = arith.mulf %84, %88 : vector<2x32xf32>
    %90 = arith.negf %73 : vector<2x128xf32>
    %91 = math.exp %90 : vector<2x128xf32>
    %cst_28 = arith.constant 1.000000e+00 : f32
    %92 = vector.broadcast %cst_28 : f32 to vector<2x128xf32>
    %93 = arith.addf %92, %91 : vector<2x128xf32>
    %94 = arith.divf %92, %93 : vector<2x128xf32>
    %95 = math.tanh %73 : vector<2x128xf32>
    %96 = arith.select %25, %95, %94 : vector<2x128xi1>, vector<2x128xf32>
    %97 = vector.extract_strided_slice %96 {offsets = [0, 0], sizes = [2, 32], strides = [1, 1]} : vector<2x128xf32> to vector<2x32xf32>
    %98 = vector.extract_strided_slice %96 {offsets = [0, 32], sizes = [2, 32], strides = [1, 1]} : vector<2x128xf32> to vector<2x32xf32>
    %99 = vector.extract_strided_slice %96 {offsets = [0, 64], sizes = [2, 32], strides = [1, 1]} : vector<2x128xf32> to vector<2x32xf32>
    %100 = vector.extract_strided_slice %96 {offsets = [0, 96], sizes = [2, 32], strides = [1, 1]} : vector<2x128xf32> to vector<2x32xf32>
    %101 = arith.mulf %98, %65 : vector<2x32xf32>
    %102 = arith.mulf %97, %99 : vector<2x32xf32>
    %103 = arith.addf %101, %102 : vector<2x32xf32>
    %104 = math.tanh %103 : vector<2x32xf32>
    %105 = arith.mulf %100, %104 : vector<2x32xf32>
    %cst_29 = arith.constant dense<0.000000e+00> : vector<2x128xf32>
    %106 = tpu.matmul %89, %18, %cst_29 {dimension_numbers = #tpu.dot_dimension_numbers<[1], [0], [0], [1], [0, 0, 1, 1], [], []>} : vector<2x32xf32>, vector<32x128xf32>, vector<2x128xf32> -> vector<2x128xf32>
    %107 = vector.extract_strided_slice %12 {offsets = [4, 0], sizes = [2, 128], strides = [1, 1]} : vector<16x128xf32> to vector<2x128xf32>
    %108 = arith.addf %106, %107 : vector<2x128xf32>
    %cst_30 = arith.constant dense<0.000000e+00> : vector<2x128xf32>
    %109 = tpu.matmul %105, %19, %cst_30 {dimension_numbers = #tpu.dot_dimension_numbers<[1], [0], [0], [1], [0, 0, 1, 1], [], []>} : vector<2x32xf32>, vector<32x128xf32>, vector<2x128xf32> -> vector<2x128xf32>
    %110 = vector.extract_strided_slice %17 {offsets = [10, 0], sizes = [2, 128], strides = [1, 1]} : vector<16x128xf32> to vector<2x128xf32>
    %111 = arith.addf %109, %110 : vector<2x128xf32>
    %112 = arith.negf %108 : vector<2x128xf32>
    %113 = math.exp %112 : vector<2x128xf32>
    %cst_31 = arith.constant 1.000000e+00 : f32
    %114 = vector.broadcast %cst_31 : f32 to vector<2x128xf32>
    %115 = arith.addf %114, %113 : vector<2x128xf32>
    %116 = arith.divf %114, %115 : vector<2x128xf32>
    %117 = math.tanh %108 : vector<2x128xf32>
    %118 = arith.select %25, %117, %116 : vector<2x128xi1>, vector<2x128xf32>
    %119 = vector.extract_strided_slice %118 {offsets = [0, 0], sizes = [2, 32], strides = [1, 1]} : vector<2x128xf32> to vector<2x32xf32>
    %120 = vector.extract_strided_slice %118 {offsets = [0, 32], sizes = [2, 32], strides = [1, 1]} : vector<2x128xf32> to vector<2x32xf32>
    %121 = vector.extract_strided_slice %118 {offsets = [0, 64], sizes = [2, 32], strides = [1, 1]} : vector<2x128xf32> to vector<2x32xf32>
    %122 = vector.extract_strided_slice %118 {offsets = [0, 96], sizes = [2, 32], strides = [1, 1]} : vector<2x128xf32> to vector<2x32xf32>
    %123 = arith.mulf %120, %87 : vector<2x32xf32>
    %124 = arith.mulf %119, %121 : vector<2x32xf32>
    %125 = arith.addf %123, %124 : vector<2x32xf32>
    %126 = math.tanh %125 : vector<2x32xf32>
    %127 = arith.mulf %122, %126 : vector<2x32xf32>
    %128 = arith.negf %111 : vector<2x128xf32>
    %129 = math.exp %128 : vector<2x128xf32>
    %cst_32 = arith.constant 1.000000e+00 : f32
    %130 = vector.broadcast %cst_32 : f32 to vector<2x128xf32>
    %131 = arith.addf %130, %129 : vector<2x128xf32>
    %132 = arith.divf %130, %131 : vector<2x128xf32>
    %133 = math.tanh %111 : vector<2x128xf32>
    %134 = arith.select %25, %133, %132 : vector<2x128xi1>, vector<2x128xf32>
    %135 = vector.extract_strided_slice %134 {offsets = [0, 0], sizes = [2, 32], strides = [1, 1]} : vector<2x128xf32> to vector<2x32xf32>
    %136 = vector.extract_strided_slice %134 {offsets = [0, 32], sizes = [2, 32], strides = [1, 1]} : vector<2x128xf32> to vector<2x32xf32>
    %137 = vector.extract_strided_slice %134 {offsets = [0, 64], sizes = [2, 32], strides = [1, 1]} : vector<2x128xf32> to vector<2x32xf32>
    %138 = vector.extract_strided_slice %134 {offsets = [0, 96], sizes = [2, 32], strides = [1, 1]} : vector<2x128xf32> to vector<2x32xf32>
    %139 = arith.mulf %136, %103 : vector<2x32xf32>
    %140 = arith.mulf %135, %137 : vector<2x32xf32>
    %141 = arith.addf %139, %140 : vector<2x32xf32>
    %142 = math.tanh %141 : vector<2x32xf32>
    %143 = arith.mulf %138, %142 : vector<2x32xf32>
    %cst_33 = arith.constant dense<0.000000e+00> : vector<2x128xf32>
    %144 = tpu.matmul %127, %18, %cst_33 {dimension_numbers = #tpu.dot_dimension_numbers<[1], [0], [0], [1], [0, 0, 1, 1], [], []>} : vector<2x32xf32>, vector<32x128xf32>, vector<2x128xf32> -> vector<2x128xf32>
    %145 = vector.extract_strided_slice %12 {offsets = [6, 0], sizes = [2, 128], strides = [1, 1]} : vector<16x128xf32> to vector<2x128xf32>
    %146 = arith.addf %144, %145 : vector<2x128xf32>
    %cst_34 = arith.constant dense<0.000000e+00> : vector<2x128xf32>
    %147 = tpu.matmul %143, %19, %cst_34 {dimension_numbers = #tpu.dot_dimension_numbers<[1], [0], [0], [1], [0, 0, 1, 1], [], []>} : vector<2x32xf32>, vector<32x128xf32>, vector<2x128xf32> -> vector<2x128xf32>
    %148 = vector.extract_strided_slice %17 {offsets = [8, 0], sizes = [2, 128], strides = [1, 1]} : vector<16x128xf32> to vector<2x128xf32>
    %149 = arith.addf %147, %148 : vector<2x128xf32>
    %150 = arith.negf %146 : vector<2x128xf32>
    %151 = math.exp %150 : vector<2x128xf32>
    %cst_35 = arith.constant 1.000000e+00 : f32
    %152 = vector.broadcast %cst_35 : f32 to vector<2x128xf32>
    %153 = arith.addf %152, %151 : vector<2x128xf32>
    %154 = arith.divf %152, %153 : vector<2x128xf32>
    %155 = math.tanh %146 : vector<2x128xf32>
    %156 = arith.select %25, %155, %154 : vector<2x128xi1>, vector<2x128xf32>
    %157 = vector.extract_strided_slice %156 {offsets = [0, 0], sizes = [2, 32], strides = [1, 1]} : vector<2x128xf32> to vector<2x32xf32>
    %158 = vector.extract_strided_slice %156 {offsets = [0, 32], sizes = [2, 32], strides = [1, 1]} : vector<2x128xf32> to vector<2x32xf32>
    %159 = vector.extract_strided_slice %156 {offsets = [0, 64], sizes = [2, 32], strides = [1, 1]} : vector<2x128xf32> to vector<2x32xf32>
    %160 = vector.extract_strided_slice %156 {offsets = [0, 96], sizes = [2, 32], strides = [1, 1]} : vector<2x128xf32> to vector<2x32xf32>
    %161 = arith.mulf %158, %125 : vector<2x32xf32>
    %162 = arith.mulf %157, %159 : vector<2x32xf32>
    %163 = arith.addf %161, %162 : vector<2x32xf32>
    %164 = math.tanh %163 : vector<2x32xf32>
    %165 = arith.mulf %160, %164 : vector<2x32xf32>
    %166 = arith.negf %149 : vector<2x128xf32>
    %167 = math.exp %166 : vector<2x128xf32>
    %cst_36 = arith.constant 1.000000e+00 : f32
    %168 = vector.broadcast %cst_36 : f32 to vector<2x128xf32>
    %169 = arith.addf %168, %167 : vector<2x128xf32>
    %170 = arith.divf %168, %169 : vector<2x128xf32>
    %171 = math.tanh %149 : vector<2x128xf32>
    %172 = arith.select %25, %171, %170 : vector<2x128xi1>, vector<2x128xf32>
    %173 = vector.extract_strided_slice %172 {offsets = [0, 0], sizes = [2, 32], strides = [1, 1]} : vector<2x128xf32> to vector<2x32xf32>
    %174 = vector.extract_strided_slice %172 {offsets = [0, 32], sizes = [2, 32], strides = [1, 1]} : vector<2x128xf32> to vector<2x32xf32>
    %175 = vector.extract_strided_slice %172 {offsets = [0, 64], sizes = [2, 32], strides = [1, 1]} : vector<2x128xf32> to vector<2x32xf32>
    %176 = vector.extract_strided_slice %172 {offsets = [0, 96], sizes = [2, 32], strides = [1, 1]} : vector<2x128xf32> to vector<2x32xf32>
    %177 = arith.mulf %174, %141 : vector<2x32xf32>
    %178 = arith.mulf %173, %175 : vector<2x32xf32>
    %179 = arith.addf %177, %178 : vector<2x32xf32>
    %180 = math.tanh %179 : vector<2x32xf32>
    %181 = arith.mulf %176, %180 : vector<2x32xf32>
    %cst_37 = arith.constant dense<0.000000e+00> : vector<2x128xf32>
    %182 = tpu.matmul %165, %18, %cst_37 {dimension_numbers = #tpu.dot_dimension_numbers<[1], [0], [0], [1], [0, 0, 1, 1], [], []>} : vector<2x32xf32>, vector<32x128xf32>, vector<2x128xf32> -> vector<2x128xf32>
    %183 = vector.extract_strided_slice %12 {offsets = [8, 0], sizes = [2, 128], strides = [1, 1]} : vector<16x128xf32> to vector<2x128xf32>
    %184 = arith.addf %182, %183 : vector<2x128xf32>
    %cst_38 = arith.constant dense<0.000000e+00> : vector<2x128xf32>
    %185 = tpu.matmul %181, %19, %cst_38 {dimension_numbers = #tpu.dot_dimension_numbers<[1], [0], [0], [1], [0, 0, 1, 1], [], []>} : vector<2x32xf32>, vector<32x128xf32>, vector<2x128xf32> -> vector<2x128xf32>
    %186 = vector.extract_strided_slice %17 {offsets = [6, 0], sizes = [2, 128], strides = [1, 1]} : vector<16x128xf32> to vector<2x128xf32>
    %187 = arith.addf %185, %186 : vector<2x128xf32>
    %188 = arith.negf %184 : vector<2x128xf32>
    %189 = math.exp %188 : vector<2x128xf32>
    %cst_39 = arith.constant 1.000000e+00 : f32
    %190 = vector.broadcast %cst_39 : f32 to vector<2x128xf32>
    %191 = arith.addf %190, %189 : vector<2x128xf32>
    %192 = arith.divf %190, %191 : vector<2x128xf32>
    %193 = math.tanh %184 : vector<2x128xf32>
    %194 = arith.select %25, %193, %192 : vector<2x128xi1>, vector<2x128xf32>
    %195 = vector.extract_strided_slice %194 {offsets = [0, 0], sizes = [2, 32], strides = [1, 1]} : vector<2x128xf32> to vector<2x32xf32>
    %196 = vector.extract_strided_slice %194 {offsets = [0, 32], sizes = [2, 32], strides = [1, 1]} : vector<2x128xf32> to vector<2x32xf32>
    %197 = vector.extract_strided_slice %194 {offsets = [0, 64], sizes = [2, 32], strides = [1, 1]} : vector<2x128xf32> to vector<2x32xf32>
    %198 = vector.extract_strided_slice %194 {offsets = [0, 96], sizes = [2, 32], strides = [1, 1]} : vector<2x128xf32> to vector<2x32xf32>
    %199 = arith.mulf %196, %163 : vector<2x32xf32>
    %200 = arith.mulf %195, %197 : vector<2x32xf32>
    %201 = arith.addf %199, %200 : vector<2x32xf32>
    %202 = math.tanh %201 : vector<2x32xf32>
    %203 = arith.mulf %198, %202 : vector<2x32xf32>
    %204 = arith.negf %187 : vector<2x128xf32>
    %205 = math.exp %204 : vector<2x128xf32>
    %cst_40 = arith.constant 1.000000e+00 : f32
    %206 = vector.broadcast %cst_40 : f32 to vector<2x128xf32>
    %207 = arith.addf %206, %205 : vector<2x128xf32>
    %208 = arith.divf %206, %207 : vector<2x128xf32>
    %209 = math.tanh %187 : vector<2x128xf32>
    %210 = arith.select %25, %209, %208 : vector<2x128xi1>, vector<2x128xf32>
    %211 = vector.extract_strided_slice %210 {offsets = [0, 0], sizes = [2, 32], strides = [1, 1]} : vector<2x128xf32> to vector<2x32xf32>
    %212 = vector.extract_strided_slice %210 {offsets = [0, 32], sizes = [2, 32], strides = [1, 1]} : vector<2x128xf32> to vector<2x32xf32>
    %213 = vector.extract_strided_slice %210 {offsets = [0, 64], sizes = [2, 32], strides = [1, 1]} : vector<2x128xf32> to vector<2x32xf32>
    %214 = vector.extract_strided_slice %210 {offsets = [0, 96], sizes = [2, 32], strides = [1, 1]} : vector<2x128xf32> to vector<2x32xf32>
    %215 = arith.mulf %212, %179 : vector<2x32xf32>
    %216 = arith.mulf %211, %213 : vector<2x32xf32>
    %217 = arith.addf %215, %216 : vector<2x32xf32>
    %218 = math.tanh %217 : vector<2x32xf32>
    %219 = arith.mulf %214, %218 : vector<2x32xf32>
    %cst_41 = arith.constant dense<0.000000e+00> : vector<2x128xf32>
    %220 = tpu.matmul %203, %18, %cst_41 {dimension_numbers = #tpu.dot_dimension_numbers<[1], [0], [0], [1], [0, 0, 1, 1], [], []>} : vector<2x32xf32>, vector<32x128xf32>, vector<2x128xf32> -> vector<2x128xf32>
    %221 = vector.extract_strided_slice %12 {offsets = [10, 0], sizes = [2, 128], strides = [1, 1]} : vector<16x128xf32> to vector<2x128xf32>
    %222 = arith.addf %220, %221 : vector<2x128xf32>
    %cst_42 = arith.constant dense<0.000000e+00> : vector<2x128xf32>
    %223 = tpu.matmul %219, %19, %cst_42 {dimension_numbers = #tpu.dot_dimension_numbers<[1], [0], [0], [1], [0, 0, 1, 1], [], []>} : vector<2x32xf32>, vector<32x128xf32>, vector<2x128xf32> -> vector<2x128xf32>
    %224 = vector.extract_strided_slice %17 {offsets = [4, 0], sizes = [2, 128], strides = [1, 1]} : vector<16x128xf32> to vector<2x128xf32>
    %225 = arith.addf %223, %224 : vector<2x128xf32>
    %226 = arith.negf %222 : vector<2x128xf32>
    %227 = math.exp %226 : vector<2x128xf32>
    %cst_43 = arith.constant 1.000000e+00 : f32
    %228 = vector.broadcast %cst_43 : f32 to vector<2x128xf32>
    %229 = arith.addf %228, %227 : vector<2x128xf32>
    %230 = arith.divf %228, %229 : vector<2x128xf32>
    %231 = math.tanh %222 : vector<2x128xf32>
    %232 = arith.select %25, %231, %230 : vector<2x128xi1>, vector<2x128xf32>
    %233 = vector.extract_strided_slice %232 {offsets = [0, 0], sizes = [2, 32], strides = [1, 1]} : vector<2x128xf32> to vector<2x32xf32>
    %234 = vector.extract_strided_slice %232 {offsets = [0, 32], sizes = [2, 32], strides = [1, 1]} : vector<2x128xf32> to vector<2x32xf32>
    %235 = vector.extract_strided_slice %232 {offsets = [0, 64], sizes = [2, 32], strides = [1, 1]} : vector<2x128xf32> to vector<2x32xf32>
    %236 = vector.extract_strided_slice %232 {offsets = [0, 96], sizes = [2, 32], strides = [1, 1]} : vector<2x128xf32> to vector<2x32xf32>
    %237 = arith.mulf %234, %201 : vector<2x32xf32>
    %238 = arith.mulf %233, %235 : vector<2x32xf32>
    %239 = arith.addf %237, %238 : vector<2x32xf32>
    %240 = math.tanh %239 : vector<2x32xf32>
    %241 = arith.mulf %236, %240 : vector<2x32xf32>
    %242 = arith.negf %225 : vector<2x128xf32>
    %243 = math.exp %242 : vector<2x128xf32>
    %cst_44 = arith.constant 1.000000e+00 : f32
    %244 = vector.broadcast %cst_44 : f32 to vector<2x128xf32>
    %245 = arith.addf %244, %243 : vector<2x128xf32>
    %246 = arith.divf %244, %245 : vector<2x128xf32>
    %247 = math.tanh %225 : vector<2x128xf32>
    %248 = arith.select %25, %247, %246 : vector<2x128xi1>, vector<2x128xf32>
    %249 = vector.extract_strided_slice %248 {offsets = [0, 0], sizes = [2, 32], strides = [1, 1]} : vector<2x128xf32> to vector<2x32xf32>
    %250 = vector.extract_strided_slice %248 {offsets = [0, 32], sizes = [2, 32], strides = [1, 1]} : vector<2x128xf32> to vector<2x32xf32>
    %251 = vector.extract_strided_slice %248 {offsets = [0, 64], sizes = [2, 32], strides = [1, 1]} : vector<2x128xf32> to vector<2x32xf32>
    %252 = vector.extract_strided_slice %248 {offsets = [0, 96], sizes = [2, 32], strides = [1, 1]} : vector<2x128xf32> to vector<2x32xf32>
    %253 = arith.mulf %250, %217 : vector<2x32xf32>
    %254 = arith.mulf %249, %251 : vector<2x32xf32>
    %255 = arith.addf %253, %254 : vector<2x32xf32>
    %256 = math.tanh %255 : vector<2x32xf32>
    %257 = arith.mulf %252, %256 : vector<2x32xf32>
    %cst_45 = arith.constant dense<0.000000e+00> : vector<2x128xf32>
    %258 = tpu.matmul %241, %18, %cst_45 {dimension_numbers = #tpu.dot_dimension_numbers<[1], [0], [0], [1], [0, 0, 1, 1], [], []>} : vector<2x32xf32>, vector<32x128xf32>, vector<2x128xf32> -> vector<2x128xf32>
    %259 = vector.extract_strided_slice %12 {offsets = [12, 0], sizes = [2, 128], strides = [1, 1]} : vector<16x128xf32> to vector<2x128xf32>
    %260 = arith.addf %258, %259 : vector<2x128xf32>
    %cst_46 = arith.constant dense<0.000000e+00> : vector<2x128xf32>
    %261 = tpu.matmul %257, %19, %cst_46 {dimension_numbers = #tpu.dot_dimension_numbers<[1], [0], [0], [1], [0, 0, 1, 1], [], []>} : vector<2x32xf32>, vector<32x128xf32>, vector<2x128xf32> -> vector<2x128xf32>
    %262 = vector.extract_strided_slice %17 {offsets = [2, 0], sizes = [2, 128], strides = [1, 1]} : vector<16x128xf32> to vector<2x128xf32>
    %263 = arith.addf %261, %262 : vector<2x128xf32>
    %264 = arith.negf %260 : vector<2x128xf32>
    %265 = math.exp %264 : vector<2x128xf32>
    %cst_47 = arith.constant 1.000000e+00 : f32
    %266 = vector.broadcast %cst_47 : f32 to vector<2x128xf32>
    %267 = arith.addf %266, %265 : vector<2x128xf32>
    %268 = arith.divf %266, %267 : vector<2x128xf32>
    %269 = math.tanh %260 : vector<2x128xf32>
    %270 = arith.select %25, %269, %268 : vector<2x128xi1>, vector<2x128xf32>
    %271 = vector.extract_strided_slice %270 {offsets = [0, 0], sizes = [2, 32], strides = [1, 1]} : vector<2x128xf32> to vector<2x32xf32>
    %272 = vector.extract_strided_slice %270 {offsets = [0, 32], sizes = [2, 32], strides = [1, 1]} : vector<2x128xf32> to vector<2x32xf32>
    %273 = vector.extract_strided_slice %270 {offsets = [0, 64], sizes = [2, 32], strides = [1, 1]} : vector<2x128xf32> to vector<2x32xf32>
    %274 = vector.extract_strided_slice %270 {offsets = [0, 96], sizes = [2, 32], strides = [1, 1]} : vector<2x128xf32> to vector<2x32xf32>
    %275 = arith.mulf %272, %239 : vector<2x32xf32>
    %276 = arith.mulf %271, %273 : vector<2x32xf32>
    %277 = arith.addf %275, %276 : vector<2x32xf32>
    %278 = math.tanh %277 : vector<2x32xf32>
    %279 = arith.mulf %274, %278 : vector<2x32xf32>
    %280 = arith.negf %263 : vector<2x128xf32>
    %281 = math.exp %280 : vector<2x128xf32>
    %cst_48 = arith.constant 1.000000e+00 : f32
    %282 = vector.broadcast %cst_48 : f32 to vector<2x128xf32>
    %283 = arith.addf %282, %281 : vector<2x128xf32>
    %284 = arith.divf %282, %283 : vector<2x128xf32>
    %285 = math.tanh %263 : vector<2x128xf32>
    %286 = arith.select %25, %285, %284 : vector<2x128xi1>, vector<2x128xf32>
    %287 = vector.extract_strided_slice %286 {offsets = [0, 0], sizes = [2, 32], strides = [1, 1]} : vector<2x128xf32> to vector<2x32xf32>
    %288 = vector.extract_strided_slice %286 {offsets = [0, 32], sizes = [2, 32], strides = [1, 1]} : vector<2x128xf32> to vector<2x32xf32>
    %289 = vector.extract_strided_slice %286 {offsets = [0, 64], sizes = [2, 32], strides = [1, 1]} : vector<2x128xf32> to vector<2x32xf32>
    %290 = vector.extract_strided_slice %286 {offsets = [0, 96], sizes = [2, 32], strides = [1, 1]} : vector<2x128xf32> to vector<2x32xf32>
    %291 = arith.mulf %288, %255 : vector<2x32xf32>
    %292 = arith.mulf %287, %289 : vector<2x32xf32>
    %293 = arith.addf %291, %292 : vector<2x32xf32>
    %294 = math.tanh %293 : vector<2x32xf32>
    %295 = arith.mulf %290, %294 : vector<2x32xf32>
    %cst_49 = arith.constant dense<0.000000e+00> : vector<2x128xf32>
    %296 = tpu.matmul %279, %18, %cst_49 {dimension_numbers = #tpu.dot_dimension_numbers<[1], [0], [0], [1], [0, 0, 1, 1], [], []>} : vector<2x32xf32>, vector<32x128xf32>, vector<2x128xf32> -> vector<2x128xf32>
    %297 = vector.extract_strided_slice %12 {offsets = [14, 0], sizes = [2, 128], strides = [1, 1]} : vector<16x128xf32> to vector<2x128xf32>
    %298 = arith.addf %296, %297 : vector<2x128xf32>
    %cst_50 = arith.constant dense<0.000000e+00> : vector<2x128xf32>
    %299 = tpu.matmul %295, %19, %cst_50 {dimension_numbers = #tpu.dot_dimension_numbers<[1], [0], [0], [1], [0, 0, 1, 1], [], []>} : vector<2x32xf32>, vector<32x128xf32>, vector<2x128xf32> -> vector<2x128xf32>
    %300 = vector.extract_strided_slice %17 {offsets = [0, 0], sizes = [2, 128], strides = [1, 1]} : vector<16x128xf32> to vector<2x128xf32>
    %301 = arith.addf %299, %300 : vector<2x128xf32>
    %302 = arith.negf %298 : vector<2x128xf32>
    %303 = math.exp %302 : vector<2x128xf32>
    %cst_51 = arith.constant 1.000000e+00 : f32
    %304 = vector.broadcast %cst_51 : f32 to vector<2x128xf32>
    %305 = arith.addf %304, %303 : vector<2x128xf32>
    %306 = arith.divf %304, %305 : vector<2x128xf32>
    %307 = math.tanh %298 : vector<2x128xf32>
    %308 = arith.select %25, %307, %306 : vector<2x128xi1>, vector<2x128xf32>
    %309 = vector.extract_strided_slice %308 {offsets = [0, 0], sizes = [2, 32], strides = [1, 1]} : vector<2x128xf32> to vector<2x32xf32>
    %310 = vector.extract_strided_slice %308 {offsets = [0, 32], sizes = [2, 32], strides = [1, 1]} : vector<2x128xf32> to vector<2x32xf32>
    %311 = vector.extract_strided_slice %308 {offsets = [0, 64], sizes = [2, 32], strides = [1, 1]} : vector<2x128xf32> to vector<2x32xf32>
    %312 = vector.extract_strided_slice %308 {offsets = [0, 96], sizes = [2, 32], strides = [1, 1]} : vector<2x128xf32> to vector<2x32xf32>
    %313 = arith.mulf %310, %277 : vector<2x32xf32>
    %314 = arith.mulf %309, %311 : vector<2x32xf32>
    %315 = arith.addf %313, %314 : vector<2x32xf32>
    %316 = math.tanh %315 : vector<2x32xf32>
    %317 = arith.mulf %312, %316 : vector<2x32xf32>
    %318 = arith.negf %301 : vector<2x128xf32>
    %319 = math.exp %318 : vector<2x128xf32>
    %cst_52 = arith.constant 1.000000e+00 : f32
    %320 = vector.broadcast %cst_52 : f32 to vector<2x128xf32>
    %321 = arith.addf %320, %319 : vector<2x128xf32>
    %322 = arith.divf %320, %321 : vector<2x128xf32>
    %323 = math.tanh %301 : vector<2x128xf32>
    %324 = arith.select %25, %323, %322 : vector<2x128xi1>, vector<2x128xf32>
    %325 = vector.extract_strided_slice %324 {offsets = [0, 0], sizes = [2, 32], strides = [1, 1]} : vector<2x128xf32> to vector<2x32xf32>
    %326 = vector.extract_strided_slice %324 {offsets = [0, 32], sizes = [2, 32], strides = [1, 1]} : vector<2x128xf32> to vector<2x32xf32>
    %327 = vector.extract_strided_slice %324 {offsets = [0, 64], sizes = [2, 32], strides = [1, 1]} : vector<2x128xf32> to vector<2x32xf32>
    %328 = vector.extract_strided_slice %324 {offsets = [0, 96], sizes = [2, 32], strides = [1, 1]} : vector<2x128xf32> to vector<2x32xf32>
    %329 = arith.mulf %326, %293 : vector<2x32xf32>
    %330 = arith.mulf %325, %327 : vector<2x32xf32>
    %331 = arith.addf %329, %330 : vector<2x32xf32>
    %332 = math.tanh %331 : vector<2x32xf32>
    %333 = arith.mulf %328, %332 : vector<2x32xf32>
    %334 = tpu.concatenate %317, %333 in 1 : vector<2x32xf32>, vector<2x32xf32> -> vector<2x64xf32>
    %c0_53 = arith.constant 0 : index
    %c0_54 = arith.constant 0 : index
    %335 = vector.load %arg8[%c0_53, %c0_54] : memref<64x20xf32, #tpu.memory_space<vmem>>, vector<64x20xf32>
    %cst_55 = arith.constant dense<0.000000e+00> : vector<2x20xf32>
    %336 = tpu.matmul %334, %335, %cst_55 {dimension_numbers = #tpu.dot_dimension_numbers<[1], [0], [0], [1], [0, 0, 1, 1], [], []>} : vector<2x64xf32>, vector<64x20xf32>, vector<2x20xf32> -> vector<2x20xf32>
    %c0_56 = arith.constant 0 : index
    %c0_57 = arith.constant 0 : index
    %337 = vector.load %arg9[%c0_56, %c0_57] : memref<1x20xf32, #tpu.memory_space<vmem>>, vector<1x20xf32>
    %338 = vector.broadcast %337 : vector<1x20xf32> to vector<2x20xf32>
    %339 = arith.addf %336, %338 : vector<2x20xf32>
    %cst_58 = arith.constant 0.000000e+00 : f32
    %340 = vector.broadcast %cst_58 : f32 to vector<2x20xf32>
    %341 = arith.maximumf %339, %340 : vector<2x20xf32>
    %c0_59 = arith.constant 0 : index
    %c0_60 = arith.constant 0 : index
    %342 = vector.load %arg10[%c0_59, %c0_60] : memref<20x2xf32, #tpu.memory_space<vmem>>, vector<20x2xf32>
    %cst_61 = arith.constant dense<0.000000e+00> : vector<2x2xf32>
    %343 = tpu.matmul %341, %342, %cst_61 {dimension_numbers = #tpu.dot_dimension_numbers<[1], [0], [0], [1], [0, 0, 1, 1], [], []>} : vector<2x20xf32>, vector<20x2xf32>, vector<2x2xf32> -> vector<2x2xf32>
    %c0_62 = arith.constant 0 : index
    %c0_63 = arith.constant 0 : index
    %344 = vector.load %arg11[%c0_62, %c0_63] : memref<1x2xf32, #tpu.memory_space<vmem>>, vector<1x2xf32>
    %345 = vector.broadcast %344 : vector<1x2xf32> to vector<2x2xf32>
    %346 = arith.addf %343, %345 : vector<2x2xf32>
    %cst_64 = arith.constant dense<0xFF800000> : vector<2xf32>
    %347 = vector.multi_reduction <maximumf>, %346, %cst_64 [1] : vector<2x2xf32> to vector<2xf32>
    %348 = vector.shape_cast %347 : vector<2xf32> to vector<2x1xf32>
    %349 = vector.broadcast %348 : vector<2x1xf32> to vector<2x2xf32>
    %350 = arith.subf %346, %349 : vector<2x2xf32>
    %351 = math.exp %350 : vector<2x2xf32>
    %cst_65 = arith.constant dense<0.000000e+00> : vector<2xf32>
    %352 = vector.multi_reduction <add>, %351, %cst_65 [1] : vector<2x2xf32> to vector<2xf32>
    %353 = vector.shape_cast %352 : vector<2xf32> to vector<2x1xf32>
    %354 = math.log %353 : vector<2x1xf32>
    %355 = vector.broadcast %354 : vector<2x1xf32> to vector<2x2xf32>
    %356 = arith.subf %350, %355 : vector<2x2xf32>
    %c0_66 = arith.constant 0 : index
    %c0_67 = arith.constant 0 : index
    %357 = vector.load %arg12[%c0_66, %c0_67] : memref<2x2xf32, #tpu.memory_space<vmem>>, vector<2x2xf32>
    tpu.vector_store %arg12[%c0_66, %c0_67], %356 {strides = array<i32>} : memref<2x2xf32, #tpu.memory_space<vmem>>, vector<2x2xf32>,
    return
  }
}

</mosaic_0001>

<llo_original>
// kernel: _forward_impl.1
$region0: #{_forward_impl.1}
  #allocation0 [shape = 'u32[]', space=smem, size = 0x4, offset = 0x4, fixed_abs, tag = 'smem constant byte address 0x4 - core index']
  #allocation1 [shape = 'u32[144,128]{1,0:T(1,128)}', space=vmem, size = 0x12000, scoped, tag = 'internal scratch']
  %s0 = inlined_call_operand.vmem [shape: s32[16,1], index: 0, kind: input, shape index: {}]
  %s1 = inlined_call_operand.vmem [shape: f32[50,100], index: 1, kind: input, shape index: {}]
  %s2 = inlined_call_operand.vmem [shape: f32[100,128], index: 2, kind: input, shape index: {}]
  %s3 = inlined_call_operand.vmem [shape: f32[32,128], index: 3, kind: input, shape index: {}]
  %s4 = inlined_call_operand.vmem [shape: f32[1,128], index: 4, kind: input, shape index: {}]
  %s5 = inlined_call_operand.hbm [shape: f32[100,128], index: 5, kind: input, shape index: {}]
  %s6 = inlined_call_operand.hbm [shape: f32[32,128], index: 6, kind: input, shape index: {}]
  %s7 = inlined_call_operand.hbm [shape: f32[1,128], index: 7, kind: input, shape index: {}]
  %s8 = inlined_call_operand.vmem [shape: f32[64,20], index: 8, kind: input, shape index: {}]
  %s9 = inlined_call_operand.hbm [shape: f32[1,20], index: 9, kind: input, shape index: {}]
  %s10 = inlined_call_operand.vmem [shape: f32[20,2], index: 10, kind: input, shape index: {}]
  %s11 = inlined_call_operand.hbm [shape: f32[1,2], index: 11, kind: input, shape index: {}]
  %s12 = inlined_call_operand.hbm [shape: f32[2,2], index: 12, kind: output, shape index: {}]
  %s13 = sld [smem:[#allocation0]]
  $region78: #{_forward_impl.1} parent=0
    _
  %s15 = ssub.s32 1, %s13
  %s16 = scalar_select 0, %s15, %s13
  $region1: #{_forward_impl.1} parent=0
    #allocation2 [shape = 'u8[53248]{0}', space=vmem, size = 0xd000, scoped, tag = 'input window, operand 5, single buffered']
    #allocation3 [shape = 's32[1]{0}', space=sflag, size = 0x4, scoped, tag = 'scoped memory for _forward_impl.1']
    #allocation4 [shape = 's32[1]{0}', space=sflag, size = 0x4, scoped, tag = 'scoped memory for _forward_impl.1']
    #allocation5 [shape = 'u8[16384]{0}', space=vmem, size = 0x4000, scoped, tag = 'input window, operand 6, single buffered']
    #allocation6 [shape = 's32[1]{0}', space=sflag, size = 0x4, scoped, tag = 'scoped memory for _forward_impl.1']
    #allocation7 [shape = 'u8[512]{0}', space=vmem, size = 0x400, scoped, tag = 'input window, operand 7, single buffered']
    #allocation8 [shape = 'u8[512]{0}', space=vmem, size = 0x400, scoped, tag = 'input window, operand 9, single buffered']
    #allocation9 [shape = 's32[1]{0}', space=sflag, size = 0x4, scoped, tag = 'scoped memory for _forward_impl.1']
    #allocation10 [shape = 'u8[512]{0}', space=vmem, size = 0x400, scoped, tag = 'input window, operand 11, single buffered']
    #allocation11 [shape = 'u8[1024]{0}', space=vmem, size = 0x400, scoped, tag = 'output window, operand 0, single buffered']
    %17 = vsyncpa [#allocation3], 0
    %18 = vsyncpa [#allocation6], 0
    %19 = vsyncpa [#allocation9], 0
    %20 = vsyncpa [#allocation4], 0
    // Predicated region
    $region2: #{_forward_impl.1} parent=1 // pred_check
      _
    $region3: #{_forward_impl.1} parent=1 // pred_check_branch
      %22 = sbr.rel (0) target = $region5
    $region4: #{_forward_impl.1} parent=1 // pred_region
      _
    $region5: #{_forward_impl.1} parent=1 // pred_fallthru
      _
    // Predicated region
    $region6: #{_forward_impl.1} parent=1 // pred_check
      _
    $region7: #{_forward_impl.1} parent=1 // pred_check_branch
      %24 = sbr.rel (0) target = $region9
    $region8: #{_forward_impl.1} parent=1 // pred_region
      _
    $region9: #{_forward_impl.1} parent=1 // pred_fallthru
      _
    // Predicated region
    $region10: #{_forward_impl.1} parent=1 // pred_check
      _
    $region11: #{_forward_impl.1} parent=1 // pred_check_branch
      %26 = sbr.rel (0) target = $region13
    $region12: #{_forward_impl.1} parent=1 // pred_region
      _
    $region13: #{_forward_impl.1} parent=1 // pred_fallthru
      _
    // Predicated region
    $region14: #{_forward_impl.1} parent=1 // pred_check
      _
    $region15: #{_forward_impl.1} parent=1 // pred_check_branch
      %28 = sbr.rel (0) target = $region17
    $region16: #{_forward_impl.1} parent=1 // pred_region
      _
    $region17: #{_forward_impl.1} parent=1 // pred_fallthru
      _
    // Predicated region
    $region18: #{_forward_impl.1} parent=1 // pred_check
      _
    $region19: #{_forward_impl.1} parent=1 // pred_check_branch
      %30 = sbr.rel (0) target = $region21
    $region20: #{_forward_impl.1} parent=1 // pred_region
      _
    $region21: #{_forward_impl.1} parent=1 // pred_fallthru
      _
    // Predicated region
    $region22: #{_forward_impl.1} parent=1 // pred_check
      _
    $region23: #{_forward_impl.1} parent=1 // pred_check_branch
      %32 = sbr.rel (0) target = $region25
    $region24: #{_forward_impl.1} parent=1 // pred_region
      %s34 = ssub.s32 1664, 1664
      %35 = vsyncadd [#allocation3], %s34
      %s36 = sshll.u32 [#allocation2], 4
      %s37 = int_to_ptr.vmem [resolvable:$true] %s36
      %42 = dma.hbm_to_vmem [thread:$0]  %s5, 1664, %s37, [#allocation3], 128, 128, 8
    $region25: #{_forward_impl.1} parent=1 // pred_fallthru
      _
    // Predicated region
    $region26: #{_forward_impl.1} parent=1 // pred_check
      _
    $region27: #{_forward_impl.1} parent=1 // pred_check_branch
      %44 = sbr.rel (0) target = $region29
    $region28: #{_forward_impl.1} parent=1 // pred_region
      %s46 = ssub.s32 512, 512
      %47 = vsyncadd [#allocation6], %s46
      %s48 = sshll.u32 [#allocation5], 4
      %s49 = int_to_ptr.vmem [resolvable:$true] %s48
      %54 = dma.hbm_to_vmem [thread:$0]  %s6, 512, %s49, [#allocation6], 128, 128, 8
    $region29: #{_forward_impl.1} parent=1 // pred_fallthru
      _
    // Predicated region
    $region30: #{_forward_impl.1} parent=1 // pred_check
      _
    $region31: #{_forward_impl.1} parent=1 // pred_check_branch
      %56 = sbr.rel (0) target = $region33
    $region32: #{_forward_impl.1} parent=1 // pred_region
      %s58 = ssub.s32 16, 16
      %59 = vsyncadd [#allocation6], %s58
      %s61 = sshll.u32 [#allocation7], 4
      %s62 = int_to_ptr.vmem [resolvable:$true] %s61
      %64 = dma.hbm_to_vmem [thread:$0]  %s7, 16, %s62, [#allocation6]
    $region33: #{_forward_impl.1} parent=1 // pred_fallthru
      _
    // Predicated region
    $region34: #{_forward_impl.1} parent=1 // pred_check
      _
    $region35: #{_forward_impl.1} parent=1 // pred_check_branch
      %66 = sbr.rel (0) target = $region37
    $region36: #{_forward_impl.1} parent=1 // pred_region
      _
    $region37: #{_forward_impl.1} parent=1 // pred_fallthru
      _
    // Predicated region
    $region38: #{_forward_impl.1} parent=1 // pred_check
      _
    $region39: #{_forward_impl.1} parent=1 // pred_check_branch
      %68 = sbr.rel (0) target = $region41
    $region40: #{_forward_impl.1} parent=1 // pred_region
      %s70 = ssub.s32 16, 16
      %71 = vsyncadd [#allocation9], %s70
      %s73 = sshll.u32 [#allocation8], 4
      %s74 = int_to_ptr.vmem [resolvable:$true] %s73
      %76 = dma.hbm_to_vmem [thread:$0]  %s9, 16, %s74, [#allocation9]
    $region41: #{_forward_impl.1} parent=1 // pred_fallthru
      _
    // Predicated region
    $region42: #{_forward_impl.1} parent=1 // pred_check
      _
    $region43: #{_forward_impl.1} parent=1 // pred_check_branch
      %78 = sbr.rel (0) target = $region45
    $region44: #{_forward_impl.1} parent=1 // pred_region
      _
    $region45: #{_forward_impl.1} parent=1 // pred_fallthru
      _
    // Predicated region
    $region46: #{_forward_impl.1} parent=1 // pred_check
      _
    $region47: #{_forward_impl.1} parent=1 // pred_check_branch
      %80 = sbr.rel (0) target = $region49
    $region48: #{_forward_impl.1} parent=1 // pred_region
      %s82 = ssub.s32 16, 16
      %83 = vsyncadd [#allocation9], %s82
      %s85 = sshll.u32 [#allocation10], 4
      %s86 = int_to_ptr.vmem [resolvable:$true] %s85
      %88 = dma.hbm_to_vmem [thread:$0]  %s11, 16, %s86, [#allocation9]
    $region49: #{_forward_impl.1} parent=1 // pred_fallthru
      _
    // Predicated region
    $region50: #{_forward_impl.1} parent=1 // pred_check
      _
    $region51: #{_forward_impl.1} parent=1 // pred_check_branch
      %90 = sbr.rel (0) target = $region53
    $region52: #{_forward_impl.1} parent=1 // pred_region
      %91 = dma.done [#allocation3], 1664
    $region53: #{_forward_impl.1} parent=1 // pred_fallthru
      _
    // Predicated region
    $region54: #{_forward_impl.1} parent=1 // pred_check
      _
    $region55: #{_forward_impl.1} parent=1 // pred_check_branch
      %93 = sbr.rel (0) target = $region57
    $region56: #{_forward_impl.1} parent=1 // pred_region
      %94 = dma.done [#allocation6], 512
    $region57: #{_forward_impl.1} parent=1 // pred_fallthru
      _
    // Predicated region
    $region58: #{_forward_impl.1} parent=1 // pred_check
      _
    $region59: #{_forward_impl.1} parent=1 // pred_check_branch
      %96 = sbr.rel (0) target = $region61
    $region60: #{_forward_impl.1} parent=1 // pred_region
      %97 = dma.done [#allocation6], 16
    $region61: #{_forward_impl.1} parent=1 // pred_fallthru
      _
    // Predicated region
    $region62: #{_forward_impl.1} parent=1 // pred_check
      _
    $region63: #{_forward_impl.1} parent=1 // pred_check_branch
      %99 = sbr.rel (0) target = $region65
    $region64: #{_forward_impl.1} parent=1 // pred_region
      %100 = dma.done [#allocation9], 16
    $region65: #{_forward_impl.1} parent=1 // pred_fallthru
      _
    // Predicated region
    $region66: #{_forward_impl.1} parent=1 // pred_check
      _
    $region67: #{_forward_impl.1} parent=1 // pred_check_branch
      %102 = sbr.rel (0) target = $region69
    $region68: #{_forward_impl.1} parent=1 // pred_region
      %103 = dma.done [#allocation9], 16
    $region69: #{_forward_impl.1} parent=1 // pred_fallthru
      _
    %v104 = vld [vmem:[%s0] sm:$0xff]
    %v105 = vld [vmem:[%s0 + $0x8] sm:$0xff]
    %v106 = vlaneseq
    %v107 = vand.u32 %v106, 127
    %108 = vset.pattern.permute.xlu0 0
    %109 = vperm.xlu0 %108, %v104
    %v110 = vpop.permute.xlu0 %109
    %111 = vset.pattern.permute.xlu0 0
    %112 = vperm.xlu0 %111, %v105
    %v113 = vpop.permute.xlu0 %112
    %vm114 = vcmp.eq.s32.totalorder %v110, %v107
    %vm115 = vcmp.eq.s32.totalorder %v113, %v107
    %v116 = vsel %vm114, 1, 0
    %v117 = vsel %vm115, 1, 0
    %v118 = vcvt.s32.f32 %v116
    %v119 = vcvt.s32.f32 %v117
    %v120 = vld [vmem:[%s1] sm:$0xff]
    %v121 = vld [vmem:[%s1 + $0x8] sm:$0xff]
    %v122 = vld [vmem:[%s1 + $0x10] sm:$0xff]
    %v123 = vld [vmem:[%s1 + $0x18] sm:$0xff]
    %v124 = vld [vmem:[%s1 + $0x20] sm:$0xff]
    %v125 = vld [vmem:[%s1 + $0x28] sm:$0xff]
    %v126 = vld [vmem:[%s1 + $0x30] sm:$0x3]
    %vm127 = vcmask 408576
    %v129 = vsel %vm127, %v118, 0
    %v132 = vsel %vm127, %v119, 0
    %vm134 = vcmask 1041408
    %v136 = vsel %vm134, %v126, 0
    %138 = vmatprep.subr.mxu0 0.0
    %139 = vmatpush1.msra.mxu0 %v120
    %140 = vmatprep.subr.mxu0 0.0
    %141 = vmatpush1.msra.mxu0 %v121
    %142 = vmatprep.subr.mxu0 0.0
    %143 = vmatpush1.msra.mxu0 %v122
    %144 = vmatprep.subr.mxu0 0.0
    %145 = vmatpush1.msra.mxu0 %v123
    %146 = vmatprep.subr.mxu0 0.0
    %147 = vmatpush1.msra.mxu0 %v124
    %148 = vmatprep.subr.mxu0 0.0
    %149 = vmatpush1.msra.mxu0 %v125
    %150 = vmatprep.subr.mxu0 0.0
    %151 = vmatpush1.msra.mxu0 %v136
    %152 = vmatprep.subr.mxu0 0.0
    %153 = vmatpush1.msra.mxu0 0.0
    %154 = vmatprep.subr.mxu0 0.0
    %155 = vmatpush1.msra.mxu0 0.0
    %156 = vmatprep.subr.mxu0 0.0
    %157 = vmatpush1.msra.mxu0 0.0
    %158 = vmatprep.subr.mxu0 0.0
    %159 = vmatpush1.msra.mxu0 0.0
    %160 = vmatprep.subr.mxu0 0.0
    %161 = vmatpush1.msra.mxu0 0.0
    %162 = vmatprep.subr.mxu0 0.0
    %163 = vmatpush1.msra.mxu0 0.0
    %164 = vmatprep.subr.mxu0 0.0
    %165 = vmatpush1.msra.mxu0 0.0
    %166 = vmatprep.subr.mxu0 0.0
    %167 = vmatpush1.msra.mxu0 0.0
    %168 = vmatprep.subr.mxu0 0.0
    %169 = vmatpush1.msra.mxu0 0.0
    %170 = vmatprep.subr.mxu0 0.0
    %171 = vmatpush1.msra.mxu0 0.0
    %172 = vmatprep.subr.mxu0 0.0
    %173 = vmatpush1.msra.mxu0 0.0
    %174 = vmatprep.subr.mxu0 0.0
    %175 = vmatpush1.msra.mxu0 0.0
    %176 = vmatprep.subr.mxu0 0.0
    %177 = vmatpush1.msra.mxu0 0.0
    %178 = vmatprep.subr.mxu0 0.0
    %179 = vmatpush1.msra.mxu0 0.0
    %180 = vmatprep.subr.mxu0 0.0
    %181 = vmatpush1.msra.mxu0 0.0
    %182 = vmatprep.subr.mxu0 0.0
    %183 = vmatpush1.msra.mxu0 0.0
    %184 = vmatprep.subr.mxu0 0.0
    %185 = vmatpush1.msra.mxu0 0.0
    %186 = vmatprep.subr.mxu0 0.0
    %187 = vmatpush1.msra.mxu0 0.0
    %188 = vmatprep.subr.mxu0 0.0
    %189 = vmatpush1.msra.mxu0 0.0
    %190 = vmatprep.subr.mxu0 0.0
    %191 = vmatpush1.msra.mxu0 0.0
    %192 = vmatprep.subr.mxu0 0.0
    %193 = vmatpush1.msra.mxu0 0.0
    %194 = vmatprep.subr.mxu0 0.0
    %195 = vmatpush1.msra.mxu0 0.0
    %196 = vmatprep.subr.mxu0 0.0
    %197 = vmatpush1.msra.mxu0 0.0
    %198 = vmatprep.subr.mxu0 0.0
    %199 = vmatpush1.msra.mxu0 0.0
    %200 = vmatprep.subr.mxu0 0.0
    %201 = vmatpush1.msra.mxu0 0.0
    %202 = vmatprep.mubr.f32.mxu0 0.0
    %203 = vmatmul.mubr.f32.gmra.mrb[0].mxu0 %v129
    %v204 = vpop.f32.mrb[0].mxu0
    %v205 = vadd.f32 0.0, %v204
    %v206 = vpop.f32.mrb[0].mxu0
    %207 = vmatprep.mubr.f32.mxu0 0.0
    %208 = vmatmul.mubr.f32.gmra.mrb[0].mxu0 %v132
    %v209 = vpop.f32.mrb[0].mxu0
    %v210 = vadd.f32 0.0, %v209
    %v211 = vpop.f32.mrb[0].mxu0
    %212 = vdwg.mxu0
    %v213 = vld [vmem:[%s2] sm:$0xff]
    %v214 = vld [vmem:[%s2 + $0x8] sm:$0xff]
    %v215 = vld [vmem:[%s2 + $0x10] sm:$0xff]
    %v216 = vld [vmem:[%s2 + $0x18] sm:$0xff]
    %v217 = vld [vmem:[%s2 + $0x20] sm:$0xff]
    %v218 = vld [vmem:[%s2 + $0x28] sm:$0xff]
    %v219 = vld [vmem:[%s2 + $0x30] sm:$0xff]
    %v220 = vld [vmem:[%s2 + $0x38] sm:$0xff]
    %v221 = vld [vmem:[%s2 + $0x40] sm:$0xff]
    %v222 = vld [vmem:[%s2 + $0x48] sm:$0xff]
    %v223 = vld [vmem:[%s2 + $0x50] sm:$0xff]
    %v224 = vld [vmem:[%s2 + $0x58] sm:$0xff]
    %v225 = vld [vmem:[%s2 + $0x60] sm:$0xf]
    %v226 = vld [vmem:[%s4] sm:$0x1]
    %v228 = vlaneseq
    %v229 = vshrl.u32 %v228, 7
    %v230 = vsub.s32 0, %v229
    %v231 = vrot.slane %v226, %v230
    %vm233 = vcmask 818176
    %v235 = vsel %vm233, %v205, 0
    %v238 = vsel %vm233, %v210, 0
    %vm240 = vcmask 1043456
    %v242 = vsel %vm240, %v225, 0
    %244 = vmatprep.subr.mxu0 0.0
    %245 = vmatpush1.msra.mxu0 %v213
    %246 = vmatprep.subr.mxu0 0.0
    %247 = vmatpush1.msra.mxu0 %v214
    %248 = vmatprep.subr.mxu0 0.0
    %249 = vmatpush1.msra.mxu0 %v215
    %250 = vmatprep.subr.mxu0 0.0
    %251 = vmatpush1.msra.mxu0 %v216
    %252 = vmatprep.subr.mxu0 0.0
    %253 = vmatpush1.msra.mxu0 %v217
    %254 = vmatprep.subr.mxu0 0.0
    %255 = vmatpush1.msra.mxu0 %v218
    %256 = vmatprep.subr.mxu0 0.0
    %257 = vmatpush1.msra.mxu0 %v219
    %258 = vmatprep.subr.mxu0 0.0
    %259 = vmatpush1.msra.mxu0 %v220
    %260 = vmatprep.subr.mxu0 0.0
    %261 = vmatpush1.msra.mxu0 %v221
    %262 = vmatprep.subr.mxu0 0.0
    %263 = vmatpush1.msra.mxu0 %v222
    %264 = vmatprep.subr.mxu0 0.0
    %265 = vmatpush1.msra.mxu0 %v223
    %266 = vmatprep.subr.mxu0 0.0
    %267 = vmatpush1.msra.mxu0 %v224
    %268 = vmatprep.subr.mxu0 0.0
    %269 = vmatpush1.msra.mxu0 %v242
    %270 = vmatprep.subr.mxu0 0.0
    %271 = vmatpush1.msra.mxu0 0.0
    %272 = vmatprep.subr.mxu0 0.0
    %273 = vmatpush1.msra.mxu0 0.0
    %274 = vmatprep.subr.mxu0 0.0
    %275 = vmatpush1.msra.mxu0 0.0
    %276 = vmatprep.subr.mxu0 0.0
    %277 = vmatpush1.msra.mxu0 0.0
    %278 = vmatprep.subr.mxu0 0.0
    %279 = vmatpush1.msra.mxu0 0.0
    %280 = vmatprep.subr.mxu0 0.0
    %281 = vmatpush1.msra.mxu0 0.0
    %282 = vmatprep.subr.mxu0 0.0
    %283 = vmatpush1.msra.mxu0 0.0
    %284 = vmatprep.subr.mxu0 0.0
    %285 = vmatpush1.msra.mxu0 0.0
    %286 = vmatprep.subr.mxu0 0.0
    %287 = vmatpush1.msra.mxu0 0.0
    %288 = vmatprep.subr.mxu0 0.0
    %289 = vmatpush1.msra.mxu0 0.0
    %290 = vmatprep.subr.mxu0 0.0
    %291 = vmatpush1.msra.mxu0 0.0
    %292 = vmatprep.subr.mxu0 0.0
    %293 = vmatpush1.msra.mxu0 0.0
    %294 = vmatprep.subr.mxu0 0.0
    %295 = vmatpush1.msra.mxu0 0.0
    %296 = vmatprep.subr.mxu0 0.0
    %297 = vmatpush1.msra.mxu0 0.0
    %298 = vmatprep.subr.mxu0 0.0
    %299 = vmatpush1.msra.mxu0 0.0
    %300 = vmatprep.subr.mxu0 0.0
    %301 = vmatpush1.msra.mxu0 0.0
    %302 = vmatprep.subr.mxu0 0.0
    %303 = vmatpush1.msra.mxu0 0.0
    %304 = vmatprep.subr.mxu0 0.0
    %305 = vmatpush1.msra.mxu0 0.0
    %306 = vmatprep.subr.mxu0 0.0
    %307 = vmatpush1.msra.mxu0 0.0
    %308 = vmatprep.mubr.f32.mxu0 0.0
    %309 = vmatmul.mubr.f32.gmra.mrb[0].mxu0 %v235
    %v310 = vpop.f32.mrb[0].mxu0
    %v311 = vadd.f32 %v231, %v310
    %v312 = vpop.f32.mrb[0].mxu0
    %313 = vmatprep.mubr.f32.mxu0 0.0
    %314 = vmatmul.mubr.f32.gmra.mrb[0].mxu0 %v238
    %v315 = vpop.f32.mrb[0].mxu0
    %v316 = vadd.f32 %v231, %v315
    %v317 = vpop.f32.mrb[0].mxu0
    %318 = vdwg.mxu0
    %v319 = vld [vmem:[#allocation2] sm:$0xff]
    %v320 = vld [vmem:[#allocation2 + $0x8] sm:$0xff]
    %v321 = vld [vmem:[#allocation2 + $0x10] sm:$0xff]
    %v322 = vld [vmem:[#allocation2 + $0x18] sm:$0xff]
    %v323 = vld [vmem:[#allocation2 + $0x20] sm:$0xff]
    %v324 = vld [vmem:[#allocation2 + $0x28] sm:$0xff]
    %v325 = vld [vmem:[#allocation2 + $0x30] sm:$0xff]
    %v326 = vld [vmem:[#allocation2 + $0x38] sm:$0xff]
    %v327 = vld [vmem:[#allocation2 + $0x40] sm:$0xff]
    %v328 = vld [vmem:[#allocation2 + $0x48] sm:$0xff]
    %v329 = vld [vmem:[#allocation2 + $0x50] sm:$0xff]
    %v330 = vld [vmem:[#allocation2 + $0x58] sm:$0xff]
    %v331 = vld [vmem:[#allocation2 + $0x60] sm:$0xf]
    %v332 = vld [vmem:[#allocation7] sm:$0x1]
    %v334 = vlaneseq
    %v335 = vshrl.u32 %v334, 7
    %v336 = vsub.s32 0, %v335
    %v337 = vrot.slane %v332, %v336
    %v340 = vsel %vm240, %v331, 0
    %342 = vmatprep.subr.mxu0 0.0
    %343 = vmatpush1.msra.mxu0 %v319
    %344 = vmatprep.subr.mxu0 0.0
    %345 = vmatpush1.msra.mxu0 %v320
    %346 = vmatprep.subr.mxu0 0.0
    %347 = vmatpush1.msra.mxu0 %v321
    %348 = vmatprep.subr.mxu0 0.0
    %349 = vmatpush1.msra.mxu0 %v322
    %350 = vmatprep.subr.mxu0 0.0
    %351 = vmatpush1.msra.mxu0 %v323
    %352 = vmatprep.subr.mxu0 0.0
    %353 = vmatpush1.msra.mxu0 %v324
    %354 = vmatprep.subr.mxu0 0.0
    %355 = vmatpush1.msra.mxu0 %v325
    %356 = vmatprep.subr.mxu0 0.0
    %357 = vmatpush1.msra.mxu0 %v326
    %358 = vmatprep.subr.mxu0 0.0
    %359 = vmatpush1.msra.mxu0 %v327
    %360 = vmatprep.subr.mxu0 0.0
    %361 = vmatpush1.msra.mxu0 %v328
    %362 = vmatprep.subr.mxu0 0.0
    %363 = vmatpush1.msra.mxu0 %v329
    %364 = vmatprep.subr.mxu0 0.0
    %365 = vmatpush1.msra.mxu0 %v330
    %366 = vmatprep.subr.mxu0 0.0
    %367 = vmatpush1.msra.mxu0 %v340
    %368 = vmatprep.subr.mxu0 0.0
    %369 = vmatpush1.msra.mxu0 0.0
    %370 = vmatprep.subr.mxu0 0.0
    %371 = vmatpush1.msra.mxu0 0.0
    %372 = vmatprep.subr.mxu0 0.0
    %373 = vmatpush1.msra.mxu0 0.0
    %374 = vmatprep.subr.mxu0 0.0
    %375 = vmatpush1.msra.mxu0 0.0
    %376 = vmatprep.subr.mxu0 0.0
    %377 = vmatpush1.msra.mxu0 0.0
    %378 = vmatprep.subr.mxu0 0.0
    %379 = vmatpush1.msra.mxu0 0.0
    %380 = vmatprep.subr.mxu0 0.0
    %381 = vmatpush1.msra.mxu0 0.0
    %382 = vmatprep.subr.mxu0 0.0
    %383 = vmatpush1.msra.mxu0 0.0
    %384 = vmatprep.subr.mxu0 0.0
    %385 = vmatpush1.msra.mxu0 0.0
    %386 = vmatprep.subr.mxu0 0.0
    %387 = vmatpush1.msra.mxu0 0.0
    %388 = vmatprep.subr.mxu0 0.0
    %389 = vmatpush1.msra.mxu0 0.0
    %390 = vmatprep.subr.mxu0 0.0
    %391 = vmatpush1.msra.mxu0 0.0
    %392 = vmatprep.subr.mxu0 0.0
    %393 = vmatpush1.msra.mxu0 0.0
    %394 = vmatprep.subr.mxu0 0.0
    %395 = vmatpush1.msra.mxu0 0.0
    %396 = vmatprep.subr.mxu0 0.0
    %397 = vmatpush1.msra.mxu0 0.0
    %398 = vmatprep.subr.mxu0 0.0
    %399 = vmatpush1.msra.mxu0 0.0
    %400 = vmatprep.subr.mxu0 0.0
    %401 = vmatpush1.msra.mxu0 0.0
    %402 = vmatprep.subr.mxu0 0.0
    %403 = vmatpush1.msra.mxu0 0.0
    %404 = vmatprep.subr.mxu0 0.0
    %405 = vmatpush1.msra.mxu0 0.0
    %406 = vmatprep.mubr.f32.mxu0 0.0
    %407 = vmatmul.mubr.f32.gmra.mrb[0].mxu0 %v235
    %v408 = vpop.f32.mrb[0].mxu0
    %v409 = vadd.f32 %v337, %v408
    %v410 = vpop.f32.mrb[0].mxu0
    %411 = vmatprep.mubr.f32.mxu0 0.0
    %412 = vmatmul.mubr.f32.gmra.mrb[0].mxu0 %v238
    %v413 = vpop.f32.mrb[0].mxu0
    %v414 = vadd.f32 %v337, %v413
    %v415 = vpop.f32.mrb[0].mxu0
    %416 = vdwg.mxu0
    %v417 = vld [vmem:[%s3] sm:$0xff]
    %v418 = vld [vmem:[%s3 + $0x8] sm:$0xff]
    %v419 = vld [vmem:[%s3 + $0x10] sm:$0xff]
    %v420 = vld [vmem:[%s3 + $0x18] sm:$0xff]
    %v421 = vld [vmem:[#allocation5] sm:$0xff]
    %v422 = vld [vmem:[#allocation5 + $0x8] sm:$0xff]
    %v423 = vld [vmem:[#allocation5 + $0x10] sm:$0xff]
    %v424 = vld [vmem:[#allocation5 + $0x18] sm:$0xff]
    %vm425 = vcmp.ge.s32.totalorder %v107, 64
    %vm426 = vcmp.lt.s32.totalorder %v107, 96
    %vm427 = vmand %vm425, %vm426
    %vm428 = vcmask 261120
    %v430 = vsel %vm428, 0.0, 0
    %432 = vmatprep.subr.mxu0 0.0
    %433 = vmatpush1.msra.mxu0 %v417
    %434 = vmatprep.subr.mxu0 0.0
    %435 = vmatpush1.msra.mxu0 %v418
    %436 = vmatprep.subr.mxu0 0.0
    %437 = vmatpush1.msra.mxu0 %v419
    %438 = vmatprep.subr.mxu0 0.0
    %439 = vmatpush1.msra.mxu0 %v420
    %440 = vmatprep.subr.mxu0 0.0
    %441 = vmatpush1.msra.mxu0 0.0
    %442 = vmatprep.subr.mxu0 0.0
    %443 = vmatpush1.msra.mxu0 0.0
    %444 = vmatprep.subr.mxu0 0.0
    %445 = vmatpush1.msra.mxu0 0.0
    %446 = vmatprep.subr.mxu0 0.0
    %447 = vmatpush1.msra.mxu0 0.0
    %448 = vmatprep.subr.mxu0 0.0
    %449 = vmatpush1.msra.mxu0 0.0
    %450 = vmatprep.subr.mxu0 0.0
    %451 = vmatpush1.msra.mxu0 0.0
    %452 = vmatprep.subr.mxu0 0.0
    %453 = vmatpush1.msra.mxu0 0.0
    %454 = vmatprep.subr.mxu0 0.0
    %455 = vmatpush1.msra.mxu0 0.0
    %456 = vmatprep.subr.mxu0 0.0
    %457 = vmatpush1.msra.mxu0 0.0
    %458 = vmatprep.subr.mxu0 0.0
    %459 = vmatpush1.msra.mxu0 0.0
    %460 = vmatprep.subr.mxu0 0.0
    %461 = vmatpush1.msra.mxu0 0.0
    %462 = vmatprep.subr.mxu0 0.0
    %463 = vmatpush1.msra.mxu0 0.0
    %464 = vmatprep.subr.mxu0 0.0
    %465 = vmatpush1.msra.mxu0 0.0
    %466 = vmatprep.subr.mxu0 0.0
    %467 = vmatpush1.msra.mxu0 0.0
    %468 = vmatprep.subr.mxu0 0.0
    %469 = vmatpush1.msra.mxu0 0.0
    %470 = vmatprep.subr.mxu0 0.0
    %471 = vmatpush1.msra.mxu0 0.0
    %472 = vmatprep.subr.mxu0 0.0
    %473 = vmatpush1.msra.mxu0 0.0
    %474 = vmatprep.subr.mxu0 0.0
    %475 = vmatpush1.msra.mxu0 0.0
    %476 = vmatprep.subr.mxu0 0.0
    %477 = vmatpush1.msra.mxu0 0.0
    %478 = vmatprep.subr.mxu0 0.0
    %479 = vmatpush1.msra.mxu0 0.0
    %480 = vmatprep.subr.mxu0 0.0
    %481 = vmatpush1.msra.mxu0 0.0
    %482 = vmatprep.subr.mxu0 0.0
    %483 = vmatpush1.msra.mxu0 0.0
    %484 = vmatprep.subr.mxu0 0.0
    %485 = vmatpush1.msra.mxu0 0.0
    %486 = vmatprep.subr.mxu0 0.0
    %487 = vmatpush1.msra.mxu0 0.0
    %488 = vmatprep.subr.mxu0 0.0
    %489 = vmatpush1.msra.mxu0 0.0
    %490 = vmatprep.subr.mxu0 0.0
    %491 = vmatpush1.msra.mxu0 0.0
    %492 = vmatprep.subr.mxu0 0.0
    %493 = vmatpush1.msra.mxu0 0.0
    %494 = vmatprep.subr.mxu0 0.0
    %495 = vmatpush1.msra.mxu0 0.0
    %496 = vmatprep.mubr.f32.mxu0 0.0
    %497 = vmatmul.mubr.f32.gmra.mrb[0].mxu0 %v430
    %v498 = vpop.f32.mrb[0].mxu0
    %v499 = vadd.f32 %v311, %v498
    %v500 = vpop.f32.mrb[0].mxu0
    %501 = vdwg.mxu0
    %v503 = vrot.slane %v414, 6
    %505 = vmatprep.subr.mxu0 0.0
    %506 = vmatpush1.msra.mxu0 %v421
    %507 = vmatprep.subr.mxu0 0.0
    %508 = vmatpush1.msra.mxu0 %v422
    %509 = vmatprep.subr.mxu0 0.0
    %510 = vmatpush1.msra.mxu0 %v423
    %511 = vmatprep.subr.mxu0 0.0
    %512 = vmatpush1.msra.mxu0 %v424
    %513 = vmatprep.subr.mxu0 0.0
    %514 = vmatpush1.msra.mxu0 0.0
    %515 = vmatprep.subr.mxu0 0.0
    %516 = vmatpush1.msra.mxu0 0.0
    %517 = vmatprep.subr.mxu0 0.0
    %518 = vmatpush1.msra.mxu0 0.0
    %519 = vmatprep.subr.mxu0 0.0
    %520 = vmatpush1.msra.mxu0 0.0
    %521 = vmatprep.subr.mxu0 0.0
    %522 = vmatpush1.msra.mxu0 0.0
    %523 = vmatprep.subr.mxu0 0.0
    %524 = vmatpush1.msra.mxu0 0.0
    %525 = vmatprep.subr.mxu0 0.0
    %526 = vmatpush1.msra.mxu0 0.0
    %527 = vmatprep.subr.mxu0 0.0
    %528 = vmatpush1.msra.mxu0 0.0
    %529 = vmatprep.subr.mxu0 0.0
    %530 = vmatpush1.msra.mxu0 0.0
    %531 = vmatprep.subr.mxu0 0.0
    %532 = vmatpush1.msra.mxu0 0.0
    %533 = vmatprep.subr.mxu0 0.0
    %534 = vmatpush1.msra.mxu0 0.0
    %535 = vmatprep.subr.mxu0 0.0
    %536 = vmatpush1.msra.mxu0 0.0
    %537 = vmatprep.subr.mxu0 0.0
    %538 = vmatpush1.msra.mxu0 0.0
    %539 = vmatprep.subr.mxu0 0.0
    %540 = vmatpush1.msra.mxu0 0.0
    %541 = vmatprep.subr.mxu0 0.0
    %542 = vmatpush1.msra.mxu0 0.0
    %543 = vmatprep.subr.mxu0 0.0
    %544 = vmatpush1.msra.mxu0 0.0
    %545 = vmatprep.subr.mxu0 0.0
    %546 = vmatpush1.msra.mxu0 0.0
    %547 = vmatprep.subr.mxu0 0.0
    %548 = vmatpush1.msra.mxu0 0.0
    %549 = vmatprep.subr.mxu0 0.0
    %550 = vmatpush1.msra.mxu0 0.0
    %551 = vmatprep.subr.mxu0 0.0
    %552 = vmatpush1.msra.mxu0 0.0
    %553 = vmatprep.subr.mxu0 0.0
    %554 = vmatpush1.msra.mxu0 0.0
    %555 = vmatprep.subr.mxu0 0.0
    %556 = vmatpush1.msra.mxu0 0.0
    %557 = vmatprep.subr.mxu0 0.0
    %558 = vmatpush1.msra.mxu0 0.0
    %559 = vmatprep.subr.mxu0 0.0
    %560 = vmatpush1.msra.mxu0 0.0
    %561 = vmatprep.subr.mxu0 0.0
    %562 = vmatpush1.msra.mxu0 0.0
    %563 = vmatprep.subr.mxu0 0.0
    %564 = vmatpush1.msra.mxu0 0.0
    %565 = vmatprep.subr.mxu0 0.0
    %566 = vmatpush1.msra.mxu0 0.0
    %567 = vmatprep.subr.mxu0 0.0
    %568 = vmatpush1.msra.mxu0 0.0
    %569 = vmatprep.mubr.f32.mxu0 0.0
    %570 = vmatmul.mubr.f32.gmra.mrb[0].mxu0 %v430
    %v571 = vpop.f32.mrb[0].mxu0
    %v572 = vadd.f32 %v503, %v571
    %v573 = vpop.f32.mrb[0].mxu0
    %574 = vdwg.mxu0
    %v575 = vxor.u32 %v499, 2147483648
    %v576 = vmul.f32 %v575, 1.442695
    %v577 = vpow.pop %v576
    %v578 = vadd.f32 %v577, 1.0
    %v579 = vrcp.pop %v578
    %v580 = vmul.f32 1.0, %v579
    %v581 = vtanh.pop %v499
    %v582 = vsel %vm427, %v581, %v580
    %v583 = vmul.f32 %v582, 0.0
    %585 = vrot.lane.b32.xlu0 %v582, 64
    %v586 = vpop.permute.xlu0 %585
    %v588 = vmul.f32 %v582, %v586
    %590 = vrot.lane.b32.xlu0 %v588, 32
    %v591 = vpop.permute.xlu0 %590
    %v593 = vadd.f32 %v583, %v591
    %v594 = vtanh.pop %v593
    %596 = vrot.lane.b32.xlu0 %v594, 64
    %v597 = vpop.permute.xlu0 %596
    %v599 = vmul.f32 %v582, %v597
    %v600 = vxor.u32 %v572, 2147483648
    %v601 = vmul.f32 %v600, 1.442695
    %v602 = vpow.pop %v601
    %v603 = vadd.f32 %v602, 1.0
    %v604 = vrcp.pop %v603
    %v605 = vmul.f32 1.0, %v604
    %v606 = vtanh.pop %v572
    %v607 = vsel %vm427, %v606, %v605
    %v608 = vmul.f32 %v607, 0.0
    %610 = vrot.lane.b32.xlu0 %v607, 64
    %v611 = vpop.permute.xlu0 %610
    %v613 = vmul.f32 %v607, %v611
    %615 = vrot.lane.b32.xlu0 %v613, 32
    %v616 = vpop.permute.xlu0 %615
    %v618 = vadd.f32 %v608, %v616
    %v619 = vtanh.pop %v618
    %621 = vrot.lane.b32.xlu0 %v619, 64
    %v622 = vpop.permute.xlu0 %621
    %v624 = vmul.f32 %v607, %v622
    %626 = vrot.lane.b32.xlu0 %v599, 32
    %v627 = vpop.permute.xlu0 %626
    %v629 = vrot.slane %v311, 2
    %v631 = vsel %vm428, %v627, 0
    %633 = vmatprep.subr.mxu0 0.0
    %634 = vmatpush1.msra.mxu0 %v417
    %635 = vmatprep.subr.mxu0 0.0
    %636 = vmatpush1.msra.mxu0 %v418
    %637 = vmatprep.subr.mxu0 0.0
    %638 = vmatpush1.msra.mxu0 %v419
    %639 = vmatprep.subr.mxu0 0.0
    %640 = vmatpush1.msra.mxu0 %v420
    %641 = vmatprep.subr.mxu0 0.0
    %642 = vmatpush1.msra.mxu0 0.0
    %643 = vmatprep.subr.mxu0 0.0
    %644 = vmatpush1.msra.mxu0 0.0
    %645 = vmatprep.subr.mxu0 0.0
    %646 = vmatpush1.msra.mxu0 0.0
    %647 = vmatprep.subr.mxu0 0.0
    %648 = vmatpush1.msra.mxu0 0.0
    %649 = vmatprep.subr.mxu0 0.0
    %650 = vmatpush1.msra.mxu0 0.0
    %651 = vmatprep.subr.mxu0 0.0
    %652 = vmatpush1.msra.mxu0 0.0
    %653 = vmatprep.subr.mxu0 0.0
    %654 = vmatpush1.msra.mxu0 0.0
    %655 = vmatprep.subr.mxu0 0.0
    %656 = vmatpush1.msra.mxu0 0.0
    %657 = vmatprep.subr.mxu0 0.0
    %658 = vmatpush1.msra.mxu0 0.0
    %659 = vmatprep.subr.mxu0 0.0
    %660 = vmatpush1.msra.mxu0 0.0
    %661 = vmatprep.subr.mxu0 0.0
    %662 = vmatpush1.msra.mxu0 0.0
    %663 = vmatprep.subr.mxu0 0.0
    %664 = vmatpush1.msra.mxu0 0.0
    %665 = vmatprep.subr.mxu0 0.0
    %666 = vmatpush1.msra.mxu0 0.0
    %667 = vmatprep.subr.mxu0 0.0
    %668 = vmatpush1.msra.mxu0 0.0
    %669 = vmatprep.subr.mxu0 0.0
    %670 = vmatpush1.msra.mxu0 0.0
    %671 = vmatprep.subr.mxu0 0.0
    %672 = vmatpush1.msra.mxu0 0.0
    %673 = vmatprep.subr.mxu0 0.0
    %674 = vmatpush1.msra.mxu0 0.0
    %675 = vmatprep.subr.mxu0 0.0
    %676 = vmatpush1.msra.mxu0 0.0
    %677 = vmatprep.subr.mxu0 0.0
    %678 = vmatpush1.msra.mxu0 0.0
    %679 = vmatprep.subr.mxu0 0.0
    %680 = vmatpush1.msra.mxu0 0.0
    %681 = vmatprep.subr.mxu0 0.0
    %682 = vmatpush1.msra.mxu0 0.0
    %683 = vmatprep.subr.mxu0 0.0
    %684 = vmatpush1.msra.mxu0 0.0
    %685 = vmatprep.subr.mxu0 0.0
    %686 = vmatpush1.msra.mxu0 0.0
    %687 = vmatprep.subr.mxu0 0.0
    %688 = vmatpush1.msra.mxu0 0.0
    %689 = vmatprep.subr.mxu0 0.0
    %690 = vmatpush1.msra.mxu0 0.0
    %691 = vmatprep.subr.mxu0 0.0
    %692 = vmatpush1.msra.mxu0 0.0
    %693 = vmatprep.subr.mxu0 0.0
    %694 = vmatpush1.msra.mxu0 0.0
    %695 = vmatprep.subr.mxu0 0.0
    %696 = vmatpush1.msra.mxu0 0.0
    %697 = vmatprep.mubr.f32.mxu0 0.0
    %698 = vmatmul.mubr.f32.gmra.mrb[0].mxu0 %v631
    %v699 = vpop.f32.mrb[0].mxu0
    %v700 = vadd.f32 %v629, %v699
    %v701 = vpop.f32.mrb[0].mxu0
    %702 = vdwg.mxu0
    %704 = vrot.lane.b32.xlu0 %v624, 32
    %v705 = vpop.permute.xlu0 %704
    %v706 = vrot.slane %v414, 4
    %v708 = vsel %vm428, %v705, 0
    %710 = vmatprep.subr.mxu0 0.0
    %711 = vmatpush1.msra.mxu0 %v421
    %712 = vmatprep.subr.mxu0 0.0
    %713 = vmatpush1.msra.mxu0 %v422
    %714 = vmatprep.subr.mxu0 0.0
    %715 = vmatpush1.msra.mxu0 %v423
    %716 = vmatprep.subr.mxu0 0.0
    %717 = vmatpush1.msra.mxu0 %v424
    %718 = vmatprep.subr.mxu0 0.0
    %719 = vmatpush1.msra.mxu0 0.0
    %720 = vmatprep.subr.mxu0 0.0
    %721 = vmatpush1.msra.mxu0 0.0
    %722 = vmatprep.subr.mxu0 0.0
    %723 = vmatpush1.msra.mxu0 0.0
    %724 = vmatprep.subr.mxu0 0.0
    %725 = vmatpush1.msra.mxu0 0.0
    %726 = vmatprep.subr.mxu0 0.0
    %727 = vmatpush1.msra.mxu0 0.0
    %728 = vmatprep.subr.mxu0 0.0
    %729 = vmatpush1.msra.mxu0 0.0
    %730 = vmatprep.subr.mxu0 0.0
    %731 = vmatpush1.msra.mxu0 0.0
    %732 = vmatprep.subr.mxu0 0.0
    %733 = vmatpush1.msra.mxu0 0.0
    %734 = vmatprep.subr.mxu0 0.0
    %735 = vmatpush1.msra.mxu0 0.0
    %736 = vmatprep.subr.mxu0 0.0
    %737 = vmatpush1.msra.mxu0 0.0
    %738 = vmatprep.subr.mxu0 0.0
    %739 = vmatpush1.msra.mxu0 0.0
    %740 = vmatprep.subr.mxu0 0.0
    %741 = vmatpush1.msra.mxu0 0.0
    %742 = vmatprep.subr.mxu0 0.0
    %743 = vmatpush1.msra.mxu0 0.0
    %744 = vmatprep.subr.mxu0 0.0
    %745 = vmatpush1.msra.mxu0 0.0
    %746 = vmatprep.subr.mxu0 0.0
    %747 = vmatpush1.msra.mxu0 0.0
    %748 = vmatprep.subr.mxu0 0.0
    %749 = vmatpush1.msra.mxu0 0.0
    %750 = vmatprep.subr.mxu0 0.0
    %751 = vmatpush1.msra.mxu0 0.0
    %752 = vmatprep.subr.mxu0 0.0
    %753 = vmatpush1.msra.mxu0 0.0
    %754 = vmatprep.subr.mxu0 0.0
    %755 = vmatpush1.msra.mxu0 0.0
    %756 = vmatprep.subr.mxu0 0.0
    %757 = vmatpush1.msra.mxu0 0.0
    %758 = vmatprep.subr.mxu0 0.0
    %759 = vmatpush1.msra.mxu0 0.0
    %760 = vmatprep.subr.mxu0 0.0
    %761 = vmatpush1.msra.mxu0 0.0
    %762 = vmatprep.subr.mxu0 0.0
    %763 = vmatpush1.msra.mxu0 0.0
    %764 = vmatprep.subr.mxu0 0.0
    %765 = vmatpush1.msra.mxu0 0.0
    %766 = vmatprep.subr.mxu0 0.0
    %767 = vmatpush1.msra.mxu0 0.0
    %768 = vmatprep.subr.mxu0 0.0
    %769 = vmatpush1.msra.mxu0 0.0
    %770 = vmatprep.subr.mxu0 0.0
    %771 = vmatpush1.msra.mxu0 0.0
    %772 = vmatprep.subr.mxu0 0.0
    %773 = vmatpush1.msra.mxu0 0.0
    %774 = vmatprep.mubr.f32.mxu0 0.0
    %775 = vmatmul.mubr.f32.gmra.mrb[0].mxu0 %v708
    %v776 = vpop.f32.mrb[0].mxu0
    %v777 = vadd.f32 %v706, %v776
    %v778 = vpop.f32.mrb[0].mxu0
    %779 = vdwg.mxu0
    %v780 = vxor.u32 %v700, 2147483648
    %v781 = vmul.f32 %v780, 1.442695
    %v782 = vpow.pop %v781
    %v783 = vadd.f32 %v782, 1.0
    %v784 = vrcp.pop %v783
    %v785 = vmul.f32 1.0, %v784
    %v786 = vtanh.pop %v700
    %v787 = vsel %vm427, %v786, %v785
    %v788 = vmul.f32 %v787, %v593
    %790 = vrot.lane.b32.xlu0 %v787, 64
    %v791 = vpop.permute.xlu0 %790
    %v793 = vmul.f32 %v787, %v791
    %795 = vrot.lane.b32.xlu0 %v793, 32
    %v796 = vpop.permute.xlu0 %795
    %v798 = vadd.f32 %v788, %v796
    %v799 = vtanh.pop %v798
    %801 = vrot.lane.b32.xlu0 %v799, 64
    %v802 = vpop.permute.xlu0 %801
    %v804 = vmul.f32 %v787, %v802
    %v805 = vxor.u32 %v777, 2147483648
    %v806 = vmul.f32 %v805, 1.442695
    %v807 = vpow.pop %v806
    %v808 = vadd.f32 %v807, 1.0
    %v809 = vrcp.pop %v808
    %v810 = vmul.f32 1.0, %v809
    %v811 = vtanh.pop %v777
    %v812 = vsel %vm427, %v811, %v810
    %v813 = vmul.f32 %v812, %v618
    %815 = vrot.lane.b32.xlu0 %v812, 64
    %v816 = vpop.permute.xlu0 %815
    %v818 = vmul.f32 %v812, %v816
    %820 = vrot.lane.b32.xlu0 %v818, 32
    %v821 = vpop.permute.xlu0 %820
    %v823 = vadd.f32 %v813, %v821
    %v824 = vtanh.pop %v823
    %826 = vrot.lane.b32.xlu0 %v824, 64
    %v827 = vpop.permute.xlu0 %826
    %v829 = vmul.f32 %v812, %v827
    %831 = vrot.lane.b32.xlu0 %v804, 32
    %v832 = vpop.permute.xlu0 %831
    %v833 = vrot.slane %v311, 4
    %v835 = vsel %vm428, %v832, 0
    %837 = vmatprep.subr.mxu0 0.0
    %838 = vmatpush1.msra.mxu0 %v417
    %839 = vmatprep.subr.mxu0 0.0
    %840 = vmatpush1.msra.mxu0 %v418
    %841 = vmatprep.subr.mxu0 0.0
    %842 = vmatpush1.msra.mxu0 %v419
    %843 = vmatprep.subr.mxu0 0.0
    %844 = vmatpush1.msra.mxu0 %v420
    %845 = vmatprep.subr.mxu0 0.0
    %846 = vmatpush1.msra.mxu0 0.0
    %847 = vmatprep.subr.mxu0 0.0
    %848 = vmatpush1.msra.mxu0 0.0
    %849 = vmatprep.subr.mxu0 0.0
    %850 = vmatpush1.msra.mxu0 0.0
    %851 = vmatprep.subr.mxu0 0.0
    %852 = vmatpush1.msra.mxu0 0.0
    %853 = vmatprep.subr.mxu0 0.0
    %854 = vmatpush1.msra.mxu0 0.0
    %855 = vmatprep.subr.mxu0 0.0
    %856 = vmatpush1.msra.mxu0 0.0
    %857 = vmatprep.subr.mxu0 0.0
    %858 = vmatpush1.msra.mxu0 0.0
    %859 = vmatprep.subr.mxu0 0.0
    %860 = vmatpush1.msra.mxu0 0.0
    %861 = vmatprep.subr.mxu0 0.0
    %862 = vmatpush1.msra.mxu0 0.0
    %863 = vmatprep.subr.mxu0 0.0
    %864 = vmatpush1.msra.mxu0 0.0
    %865 = vmatprep.subr.mxu0 0.0
    %866 = vmatpush1.msra.mxu0 0.0
    %867 = vmatprep.subr.mxu0 0.0
    %868 = vmatpush1.msra.mxu0 0.0
    %869 = vmatprep.subr.mxu0 0.0
    %870 = vmatpush1.msra.mxu0 0.0
    %871 = vmatprep.subr.mxu0 0.0
    %872 = vmatpush1.msra.mxu0 0.0
    %873 = vmatprep.subr.mxu0 0.0
    %874 = vmatpush1.msra.mxu0 0.0
    %875 = vmatprep.subr.mxu0 0.0
    %876 = vmatpush1.msra.mxu0 0.0
    %877 = vmatprep.subr.mxu0 0.0
    %878 = vmatpush1.msra.mxu0 0.0
    %879 = vmatprep.subr.mxu0 0.0
    %880 = vmatpush1.msra.mxu0 0.0
    %881 = vmatprep.subr.mxu0 0.0
    %882 = vmatpush1.msra.mxu0 0.0
    %883 = vmatprep.subr.mxu0 0.0
    %884 = vmatpush1.msra.mxu0 0.0
    %885 = vmatprep.subr.mxu0 0.0
    %886 = vmatpush1.msra.mxu0 0.0
    %887 = vmatprep.subr.mxu0 0.0
    %888 = vmatpush1.msra.mxu0 0.0
    %889 = vmatprep.subr.mxu0 0.0
    %890 = vmatpush1.msra.mxu0 0.0
    %891 = vmatprep.subr.mxu0 0.0
    %892 = vmatpush1.msra.mxu0 0.0
    %893 = vmatprep.subr.mxu0 0.0
    %894 = vmatpush1.msra.mxu0 0.0
    %895 = vmatprep.subr.mxu0 0.0
    %896 = vmatpush1.msra.mxu0 0.0
    %897 = vmatprep.subr.mxu0 0.0
    %898 = vmatpush1.msra.mxu0 0.0
    %899 = vmatprep.subr.mxu0 0.0
    %900 = vmatpush1.msra.mxu0 0.0
    %901 = vmatprep.mubr.f32.mxu0 0.0
    %902 = vmatmul.mubr.f32.gmra.mrb[0].mxu0 %v835
    %v903 = vpop.f32.mrb[0].mxu0
    %v904 = vadd.f32 %v833, %v903
    %v905 = vpop.f32.mrb[0].mxu0
    %906 = vdwg.mxu0
    %908 = vrot.lane.b32.xlu0 %v829, 32
    %v909 = vpop.permute.xlu0 %908
    %v910 = vrot.slane %v414, 2
    %v912 = vsel %vm428, %v909, 0
    %914 = vmatprep.subr.mxu0 0.0
    %915 = vmatpush1.msra.mxu0 %v421
    %916 = vmatprep.subr.mxu0 0.0
    %917 = vmatpush1.msra.mxu0 %v422
    %918 = vmatprep.subr.mxu0 0.0
    %919 = vmatpush1.msra.mxu0 %v423
    %920 = vmatprep.subr.mxu0 0.0
    %921 = vmatpush1.msra.mxu0 %v424
    %922 = vmatprep.subr.mxu0 0.0
    %923 = vmatpush1.msra.mxu0 0.0
    %924 = vmatprep.subr.mxu0 0.0
    %925 = vmatpush1.msra.mxu0 0.0
    %926 = vmatprep.subr.mxu0 0.0
    %927 = vmatpush1.msra.mxu0 0.0
    %928 = vmatprep.subr.mxu0 0.0
    %929 = vmatpush1.msra.mxu0 0.0
    %930 = vmatprep.subr.mxu0 0.0
    %931 = vmatpush1.msra.mxu0 0.0
    %932 = vmatprep.subr.mxu0 0.0
    %933 = vmatpush1.msra.mxu0 0.0
    %934 = vmatprep.subr.mxu0 0.0
    %935 = vmatpush1.msra.mxu0 0.0
    %936 = vmatprep.subr.mxu0 0.0
    %937 = vmatpush1.msra.mxu0 0.0
    %938 = vmatprep.subr.mxu0 0.0
    %939 = vmatpush1.msra.mxu0 0.0
    %940 = vmatprep.subr.mxu0 0.0
    %941 = vmatpush1.msra.mxu0 0.0
    %942 = vmatprep.subr.mxu0 0.0
    %943 = vmatpush1.msra.mxu0 0.0
    %944 = vmatprep.subr.mxu0 0.0
    %945 = vmatpush1.msra.mxu0 0.0
    %946 = vmatprep.subr.mxu0 0.0
    %947 = vmatpush1.msra.mxu0 0.0
    %948 = vmatprep.subr.mxu0 0.0
    %949 = vmatpush1.msra.mxu0 0.0
    %950 = vmatprep.subr.mxu0 0.0
    %951 = vmatpush1.msra.mxu0 0.0
    %952 = vmatprep.subr.mxu0 0.0
    %953 = vmatpush1.msra.mxu0 0.0
    %954 = vmatprep.subr.mxu0 0.0
    %955 = vmatpush1.msra.mxu0 0.0
    %956 = vmatprep.subr.mxu0 0.0
    %957 = vmatpush1.msra.mxu0 0.0
    %958 = vmatprep.subr.mxu0 0.0
    %959 = vmatpush1.msra.mxu0 0.0
    %960 = vmatprep.subr.mxu0 0.0
    %961 = vmatpush1.msra.mxu0 0.0
    %962 = vmatprep.subr.mxu0 0.0
    %963 = vmatpush1.msra.mxu0 0.0
    %964 = vmatprep.subr.mxu0 0.0
    %965 = vmatpush1.msra.mxu0 0.0
    %966 = vmatprep.subr.mxu0 0.0
    %967 = vmatpush1.msra.mxu0 0.0
    %968 = vmatprep.subr.mxu0 0.0
    %969 = vmatpush1.msra.mxu0 0.0
    %970 = vmatprep.subr.mxu0 0.0
    %971 = vmatpush1.msra.mxu0 0.0
    %972 = vmatprep.subr.mxu0 0.0
    %973 = vmatpush1.msra.mxu0 0.0
    %974 = vmatprep.subr.mxu0 0.0
    %975 = vmatpush1.msra.mxu0 0.0
    %976 = vmatprep.subr.mxu0 0.0
    %977 = vmatpush1.msra.mxu0 0.0
    %978 = vmatprep.mubr.f32.mxu0 0.0
    %979 = vmatmul.mubr.f32.gmra.mrb[0].mxu0 %v912
    %v980 = vpop.f32.mrb[0].mxu0
    %v981 = vadd.f32 %v910, %v980
    %v982 = vpop.f32.mrb[0].mxu0
    %983 = vdwg.mxu0
    %v984 = vxor.u32 %v904, 2147483648
    %v985 = vmul.f32 %v984, 1.442695
    %v986 = vpow.pop %v985
    %v987 = vadd.f32 %v986, 1.0
    %v988 = vrcp.pop %v987
    %v989 = vmul.f32 1.0, %v988
    %v990 = vtanh.pop %v904
    %v991 = vsel %vm427, %v990, %v989
    %v992 = vmul.f32 %v991, %v798
    %994 = vrot.lane.b32.xlu0 %v991, 64
    %v995 = vpop.permute.xlu0 %994
    %v997 = vmul.f32 %v991, %v995
    %999 = vrot.lane.b32.xlu0 %v997, 32
    %v1000 = vpop.permute.xlu0 %999
    %v1002 = vadd.f32 %v992, %v1000
    %v1003 = vtanh.pop %v1002
    %1005 = vrot.lane.b32.xlu0 %v1003, 64
    %v1006 = vpop.permute.xlu0 %1005
    %v1008 = vmul.f32 %v991, %v1006
    %v1009 = vxor.u32 %v981, 2147483648
    %v1010 = vmul.f32 %v1009, 1.442695
    %v1011 = vpow.pop %v1010
    %v1012 = vadd.f32 %v1011, 1.0
    %v1013 = vrcp.pop %v1012
    %v1014 = vmul.f32 1.0, %v1013
    %v1015 = vtanh.pop %v981
    %v1016 = vsel %vm427, %v1015, %v1014
    %v1017 = vmul.f32 %v1016, %v823
    %1019 = vrot.lane.b32.xlu0 %v1016, 64
    %v1020 = vpop.permute.xlu0 %1019
    %v1022 = vmul.f32 %v1016, %v1020
    %1024 = vrot.lane.b32.xlu0 %v1022, 32
    %v1025 = vpop.permute.xlu0 %1024
    %v1027 = vadd.f32 %v1017, %v1025
    %v1028 = vtanh.pop %v1027
    %1030 = vrot.lane.b32.xlu0 %v1028, 64
    %v1031 = vpop.permute.xlu0 %1030
    %v1033 = vmul.f32 %v1016, %v1031
    %1035 = vrot.lane.b32.xlu0 %v1008, 32
    %v1036 = vpop.permute.xlu0 %1035
    %v1037 = vrot.slane %v311, 6
    %v1039 = vsel %vm428, %v1036, 0
    %1041 = vmatprep.subr.mxu0 0.0
    %1042 = vmatpush1.msra.mxu0 %v417
    %1043 = vmatprep.subr.mxu0 0.0
    %1044 = vmatpush1.msra.mxu0 %v418
    %1045 = vmatprep.subr.mxu0 0.0
    %1046 = vmatpush1.msra.mxu0 %v419
    %1047 = vmatprep.subr.mxu0 0.0
    %1048 = vmatpush1.msra.mxu0 %v420
    %1049 = vmatprep.subr.mxu0 0.0
    %1050 = vmatpush1.msra.mxu0 0.0
    %1051 = vmatprep.subr.mxu0 0.0
    %1052 = vmatpush1.msra.mxu0 0.0
    %1053 = vmatprep.subr.mxu0 0.0
    %1054 = vmatpush1.msra.mxu0 0.0
    %1055 = vmatprep.subr.mxu0 0.0
    %1056 = vmatpush1.msra.mxu0 0.0
    %1057 = vmatprep.subr.mxu0 0.0
    %1058 = vmatpush1.msra.mxu0 0.0
    %1059 = vmatprep.subr.mxu0 0.0
    %1060 = vmatpush1.msra.mxu0 0.0
    %1061 = vmatprep.subr.mxu0 0.0
    %1062 = vmatpush1.msra.mxu0 0.0
    %1063 = vmatprep.subr.mxu0 0.0
    %1064 = vmatpush1.msra.mxu0 0.0
    %1065 = vmatprep.subr.mxu0 0.0
    %1066 = vmatpush1.msra.mxu0 0.0
    %1067 = vmatprep.subr.mxu0 0.0
    %1068 = vmatpush1.msra.mxu0 0.0
    %1069 = vmatprep.subr.mxu0 0.0
    %1070 = vmatpush1.msra.mxu0 0.0
    %1071 = vmatprep.subr.mxu0 0.0
    %1072 = vmatpush1.msra.mxu0 0.0
    %1073 = vmatprep.subr.mxu0 0.0
    %1074 = vmatpush1.msra.mxu0 0.0
    %1075 = vmatprep.subr.mxu0 0.0
    %1076 = vmatpush1.msra.mxu0 0.0
    %1077 = vmatprep.subr.mxu0 0.0
    %1078 = vmatpush1.msra.mxu0 0.0
    %1079 = vmatprep.subr.mxu0 0.0
    %1080 = vmatpush1.msra.mxu0 0.0
    %1081 = vmatprep.subr.mxu0 0.0
    %1082 = vmatpush1.msra.mxu0 0.0
    %1083 = vmatprep.subr.mxu0 0.0
    %1084 = vmatpush1.msra.mxu0 0.0
    %1085 = vmatprep.subr.mxu0 0.0
    %1086 = vmatpush1.msra.mxu0 0.0
    %1087 = vmatprep.subr.mxu0 0.0
    %1088 = vmatpush1.msra.mxu0 0.0
    %1089 = vmatprep.subr.mxu0 0.0
    %1090 = vmatpush1.msra.mxu0 0.0
    %1091 = vmatprep.subr.mxu0 0.0
    %1092 = vmatpush1.msra.mxu0 0.0
    %1093 = vmatprep.subr.mxu0 0.0
    %1094 = vmatpush1.msra.mxu0 0.0
    %1095 = vmatprep.subr.mxu0 0.0
    %1096 = vmatpush1.msra.mxu0 0.0
    %1097 = vmatprep.subr.mxu0 0.0
    %1098 = vmatpush1.msra.mxu0 0.0
    %1099 = vmatprep.subr.mxu0 0.0
    %1100 = vmatpush1.msra.mxu0 0.0
    %1101 = vmatprep.subr.mxu0 0.0
    %1102 = vmatpush1.msra.mxu0 0.0
    %1103 = vmatprep.subr.mxu0 0.0
    %1104 = vmatpush1.msra.mxu0 0.0
    %1105 = vmatprep.mubr.f32.mxu0 0.0
    %1106 = vmatmul.mubr.f32.gmra.mrb[0].mxu0 %v1039
    %v1107 = vpop.f32.mrb[0].mxu0
    %v1108 = vadd.f32 %v1037, %v1107
    %v1109 = vpop.f32.mrb[0].mxu0
    %1110 = vdwg.mxu0
    %1112 = vrot.lane.b32.xlu0 %v1033, 32
    %v1113 = vpop.permute.xlu0 %1112
    %v1114 = vsel %vm428, %v1113, 0
    %1116 = vmatprep.subr.mxu0 0.0
    %1117 = vmatpush1.msra.mxu0 %v421
    %1118 = vmatprep.subr.mxu0 0.0
    %1119 = vmatpush1.msra.mxu0 %v422
    %1120 = vmatprep.subr.mxu0 0.0
    %1121 = vmatpush1.msra.mxu0 %v423
    %1122 = vmatprep.subr.mxu0 0.0
    %1123 = vmatpush1.msra.mxu0 %v424
    %1124 = vmatprep.subr.mxu0 0.0
    %1125 = vmatpush1.msra.mxu0 0.0
    %1126 = vmatprep.subr.mxu0 0.0
    %1127 = vmatpush1.msra.mxu0 0.0
    %1128 = vmatprep.subr.mxu0 0.0
    %1129 = vmatpush1.msra.mxu0 0.0
    %1130 = vmatprep.subr.mxu0 0.0
    %1131 = vmatpush1.msra.mxu0 0.0
    %1132 = vmatprep.subr.mxu0 0.0
    %1133 = vmatpush1.msra.mxu0 0.0
    %1134 = vmatprep.subr.mxu0 0.0
    %1135 = vmatpush1.msra.mxu0 0.0
    %1136 = vmatprep.subr.mxu0 0.0
    %1137 = vmatpush1.msra.mxu0 0.0
    %1138 = vmatprep.subr.mxu0 0.0
    %1139 = vmatpush1.msra.mxu0 0.0
    %1140 = vmatprep.subr.mxu0 0.0
    %1141 = vmatpush1.msra.mxu0 0.0
    %1142 = vmatprep.subr.mxu0 0.0
    %1143 = vmatpush1.msra.mxu0 0.0
    %1144 = vmatprep.subr.mxu0 0.0
    %1145 = vmatpush1.msra.mxu0 0.0
    %1146 = vmatprep.subr.mxu0 0.0
    %1147 = vmatpush1.msra.mxu0 0.0
    %1148 = vmatprep.subr.mxu0 0.0
    %1149 = vmatpush1.msra.mxu0 0.0
    %1150 = vmatprep.subr.mxu0 0.0
    %1151 = vmatpush1.msra.mxu0 0.0
    %1152 = vmatprep.subr.mxu0 0.0
    %1153 = vmatpush1.msra.mxu0 0.0
    %1154 = vmatprep.subr.mxu0 0.0
    %1155 = vmatpush1.msra.mxu0 0.0
    %1156 = vmatprep.subr.mxu0 0.0
    %1157 = vmatpush1.msra.mxu0 0.0
    %1158 = vmatprep.subr.mxu0 0.0
    %1159 = vmatpush1.msra.mxu0 0.0
    %1160 = vmatprep.subr.mxu0 0.0
    %1161 = vmatpush1.msra.mxu0 0.0
    %1162 = vmatprep.subr.mxu0 0.0
    %1163 = vmatpush1.msra.mxu0 0.0
    %1164 = vmatprep.subr.mxu0 0.0
    %1165 = vmatpush1.msra.mxu0 0.0
    %1166 = vmatprep.subr.mxu0 0.0
    %1167 = vmatpush1.msra.mxu0 0.0
    %1168 = vmatprep.subr.mxu0 0.0
    %1169 = vmatpush1.msra.mxu0 0.0
    %1170 = vmatprep.subr.mxu0 0.0
    %1171 = vmatpush1.msra.mxu0 0.0
    %1172 = vmatprep.subr.mxu0 0.0
    %1173 = vmatpush1.msra.mxu0 0.0
    %1174 = vmatprep.subr.mxu0 0.0
    %1175 = vmatpush1.msra.mxu0 0.0
    %1176 = vmatprep.subr.mxu0 0.0
    %1177 = vmatpush1.msra.mxu0 0.0
    %1178 = vmatprep.subr.mxu0 0.0
    %1179 = vmatpush1.msra.mxu0 0.0
    %1180 = vmatprep.mubr.f32.mxu0 0.0
    %1181 = vmatmul.mubr.f32.gmra.mrb[0].mxu0 %v1114
    %v1182 = vpop.f32.mrb[0].mxu0
    %v1183 = vadd.f32 %v414, %v1182
    %v1184 = vpop.f32.mrb[0].mxu0
    %1185 = vdwg.mxu0
    %v1186 = vxor.u32 %v1108, 2147483648
    %v1187 = vmul.f32 %v1186, 1.442695
    %v1188 = vpow.pop %v1187
    %v1189 = vadd.f32 %v1188, 1.0
    %v1190 = vrcp.pop %v1189
    %v1191 = vmul.f32 1.0, %v1190
    %v1192 = vtanh.pop %v1108
    %v1193 = vsel %vm427, %v1192, %v1191
    %v1194 = vmul.f32 %v1193, %v1002
    %1196 = vrot.lane.b32.xlu0 %v1193, 64
    %v1197 = vpop.permute.xlu0 %1196
    %v1199 = vmul.f32 %v1193, %v1197
    %1201 = vrot.lane.b32.xlu0 %v1199, 32
    %v1202 = vpop.permute.xlu0 %1201
    %v1204 = vadd.f32 %v1194, %v1202
    %v1205 = vtanh.pop %v1204
    %1207 = vrot.lane.b32.xlu0 %v1205, 64
    %v1208 = vpop.permute.xlu0 %1207
    %v1210 = vmul.f32 %v1193, %v1208
    %v1211 = vxor.u32 %v1183, 2147483648
    %v1212 = vmul.f32 %v1211, 1.442695
    %v1213 = vpow.pop %v1212
    %v1214 = vadd.f32 %v1213, 1.0
    %v1215 = vrcp.pop %v1214
    %v1216 = vmul.f32 1.0, %v1215
    %v1217 = vtanh.pop %v1183
    %v1218 = vsel %vm427, %v1217, %v1216
    %v1219 = vmul.f32 %v1218, %v1027
    %1221 = vrot.lane.b32.xlu0 %v1218, 64
    %v1222 = vpop.permute.xlu0 %1221
    %v1224 = vmul.f32 %v1218, %v1222
    %1226 = vrot.lane.b32.xlu0 %v1224, 32
    %v1227 = vpop.permute.xlu0 %1226
    %v1229 = vadd.f32 %v1219, %v1227
    %v1230 = vtanh.pop %v1229
    %1232 = vrot.lane.b32.xlu0 %v1230, 64
    %v1233 = vpop.permute.xlu0 %1232
    %v1235 = vmul.f32 %v1218, %v1233
    %1237 = vrot.lane.b32.xlu0 %v1210, 32
    %v1238 = vpop.permute.xlu0 %1237
    %v1239 = vsel %vm428, %v1238, 0
    %1241 = vmatprep.subr.mxu0 0.0
    %1242 = vmatpush1.msra.mxu0 %v417
    %1243 = vmatprep.subr.mxu0 0.0
    %1244 = vmatpush1.msra.mxu0 %v418
    %1245 = vmatprep.subr.mxu0 0.0
    %1246 = vmatpush1.msra.mxu0 %v419
    %1247 = vmatprep.subr.mxu0 0.0
    %1248 = vmatpush1.msra.mxu0 %v420
    %1249 = vmatprep.subr.mxu0 0.0
    %1250 = vmatpush1.msra.mxu0 0.0
    %1251 = vmatprep.subr.mxu0 0.0
    %1252 = vmatpush1.msra.mxu0 0.0
    %1253 = vmatprep.subr.mxu0 0.0
    %1254 = vmatpush1.msra.mxu0 0.0
    %1255 = vmatprep.subr.mxu0 0.0
    %1256 = vmatpush1.msra.mxu0 0.0
    %1257 = vmatprep.subr.mxu0 0.0
    %1258 = vmatpush1.msra.mxu0 0.0
    %1259 = vmatprep.subr.mxu0 0.0
    %1260 = vmatpush1.msra.mxu0 0.0
    %1261 = vmatprep.subr.mxu0 0.0
    %1262 = vmatpush1.msra.mxu0 0.0
    %1263 = vmatprep.subr.mxu0 0.0
    %1264 = vmatpush1.msra.mxu0 0.0
    %1265 = vmatprep.subr.mxu0 0.0
    %1266 = vmatpush1.msra.mxu0 0.0
    %1267 = vmatprep.subr.mxu0 0.0
    %1268 = vmatpush1.msra.mxu0 0.0
    %1269 = vmatprep.subr.mxu0 0.0
    %1270 = vmatpush1.msra.mxu0 0.0
    %1271 = vmatprep.subr.mxu0 0.0
    %1272 = vmatpush1.msra.mxu0 0.0
    %1273 = vmatprep.subr.mxu0 0.0
    %1274 = vmatpush1.msra.mxu0 0.0
    %1275 = vmatprep.subr.mxu0 0.0
    %1276 = vmatpush1.msra.mxu0 0.0
    %1277 = vmatprep.subr.mxu0 0.0
    %1278 = vmatpush1.msra.mxu0 0.0
    %1279 = vmatprep.subr.mxu0 0.0
    %1280 = vmatpush1.msra.mxu0 0.0
    %1281 = vmatprep.subr.mxu0 0.0
    %1282 = vmatpush1.msra.mxu0 0.0
    %1283 = vmatprep.subr.mxu0 0.0
    %1284 = vmatpush1.msra.mxu0 0.0
    %1285 = vmatprep.subr.mxu0 0.0
    %1286 = vmatpush1.msra.mxu0 0.0
    %1287 = vmatprep.subr.mxu0 0.0
    %1288 = vmatpush1.msra.mxu0 0.0
    %1289 = vmatprep.subr.mxu0 0.0
    %1290 = vmatpush1.msra.mxu0 0.0
    %1291 = vmatprep.subr.mxu0 0.0
    %1292 = vmatpush1.msra.mxu0 0.0
    %1293 = vmatprep.subr.mxu0 0.0
    %1294 = vmatpush1.msra.mxu0 0.0
    %1295 = vmatprep.subr.mxu0 0.0
    %1296 = vmatpush1.msra.mxu0 0.0
    %1297 = vmatprep.subr.mxu0 0.0
    %1298 = vmatpush1.msra.mxu0 0.0
    %1299 = vmatprep.subr.mxu0 0.0
    %1300 = vmatpush1.msra.mxu0 0.0
    %1301 = vmatprep.subr.mxu0 0.0
    %1302 = vmatpush1.msra.mxu0 0.0
    %1303 = vmatprep.subr.mxu0 0.0
    %1304 = vmatpush1.msra.mxu0 0.0
    %1305 = vmatprep.mubr.f32.mxu0 0.0
    %1306 = vmatmul.mubr.f32.gmra.mrb[0].mxu0 %v1239
    %v1307 = vpop.f32.mrb[0].mxu0
    %v1308 = vadd.f32 %v316, %v1307
    %v1309 = vpop.f32.mrb[0].mxu0
    %1310 = vdwg.mxu0
    %1312 = vrot.lane.b32.xlu0 %v1235, 32
    %v1313 = vpop.permute.xlu0 %1312
    %v1315 = vrot.slane %v409, 6
    %v1317 = vsel %vm428, %v1313, 0
    %1319 = vmatprep.subr.mxu0 0.0
    %1320 = vmatpush1.msra.mxu0 %v421
    %1321 = vmatprep.subr.mxu0 0.0
    %1322 = vmatpush1.msra.mxu0 %v422
    %1323 = vmatprep.subr.mxu0 0.0
    %1324 = vmatpush1.msra.mxu0 %v423
    %1325 = vmatprep.subr.mxu0 0.0
    %1326 = vmatpush1.msra.mxu0 %v424
    %1327 = vmatprep.subr.mxu0 0.0
    %1328 = vmatpush1.msra.mxu0 0.0
    %1329 = vmatprep.subr.mxu0 0.0
    %1330 = vmatpush1.msra.mxu0 0.0
    %1331 = vmatprep.subr.mxu0 0.0
    %1332 = vmatpush1.msra.mxu0 0.0
    %1333 = vmatprep.subr.mxu0 0.0
    %1334 = vmatpush1.msra.mxu0 0.0
    %1335 = vmatprep.subr.mxu0 0.0
    %1336 = vmatpush1.msra.mxu0 0.0
    %1337 = vmatprep.subr.mxu0 0.0
    %1338 = vmatpush1.msra.mxu0 0.0
    %1339 = vmatprep.subr.mxu0 0.0
    %1340 = vmatpush1.msra.mxu0 0.0
    %1341 = vmatprep.subr.mxu0 0.0
    %1342 = vmatpush1.msra.mxu0 0.0
    %1343 = vmatprep.subr.mxu0 0.0
    %1344 = vmatpush1.msra.mxu0 0.0
    %1345 = vmatprep.subr.mxu0 0.0
    %1346 = vmatpush1.msra.mxu0 0.0
    %1347 = vmatprep.subr.mxu0 0.0
    %1348 = vmatpush1.msra.mxu0 0.0
    %1349 = vmatprep.subr.mxu0 0.0
    %1350 = vmatpush1.msra.mxu0 0.0
    %1351 = vmatprep.subr.mxu0 0.0
    %1352 = vmatpush1.msra.mxu0 0.0
    %1353 = vmatprep.subr.mxu0 0.0
    %1354 = vmatpush1.msra.mxu0 0.0
    %1355 = vmatprep.subr.mxu0 0.0
    %1356 = vmatpush1.msra.mxu0 0.0
    %1357 = vmatprep.subr.mxu0 0.0
    %1358 = vmatpush1.msra.mxu0 0.0
    %1359 = vmatprep.subr.mxu0 0.0
    %1360 = vmatpush1.msra.mxu0 0.0
    %1361 = vmatprep.subr.mxu0 0.0
    %1362 = vmatpush1.msra.mxu0 0.0
    %1363 = vmatprep.subr.mxu0 0.0
    %1364 = vmatpush1.msra.mxu0 0.0
    %1365 = vmatprep.subr.mxu0 0.0
    %1366 = vmatpush1.msra.mxu0 0.0
    %1367 = vmatprep.subr.mxu0 0.0
    %1368 = vmatpush1.msra.mxu0 0.0
    %1369 = vmatprep.subr.mxu0 0.0
    %1370 = vmatpush1.msra.mxu0 0.0
    %1371 = vmatprep.subr.mxu0 0.0
    %1372 = vmatpush1.msra.mxu0 0.0
    %1373 = vmatprep.subr.mxu0 0.0
    %1374 = vmatpush1.msra.mxu0 0.0
    %1375 = vmatprep.subr.mxu0 0.0
    %1376 = vmatpush1.msra.mxu0 0.0
    %1377 = vmatprep.subr.mxu0 0.0
    %1378 = vmatpush1.msra.mxu0 0.0
    %1379 = vmatprep.subr.mxu0 0.0
    %1380 = vmatpush1.msra.mxu0 0.0
    %1381 = vmatprep.subr.mxu0 0.0
    %1382 = vmatpush1.msra.mxu0 0.0
    %1383 = vmatprep.mubr.f32.mxu0 0.0
    %1384 = vmatmul.mubr.f32.gmra.mrb[0].mxu0 %v1317
    %v1385 = vpop.f32.mrb[0].mxu0
    %v1386 = vadd.f32 %v1315, %v1385
    %v1387 = vpop.f32.mrb[0].mxu0
    %1388 = vdwg.mxu0
    %v1389 = vxor.u32 %v1308, 2147483648
    %v1390 = vmul.f32 %v1389, 1.442695
    %v1391 = vpow.pop %v1390
    %v1392 = vadd.f32 %v1391, 1.0
    %v1393 = vrcp.pop %v1392
    %v1394 = vmul.f32 1.0, %v1393
    %v1395 = vtanh.pop %v1308
    %v1396 = vsel %vm427, %v1395, %v1394
    %v1397 = vmul.f32 %v1396, %v1204
    %1399 = vrot.lane.b32.xlu0 %v1396, 64
    %v1400 = vpop.permute.xlu0 %1399
    %v1402 = vmul.f32 %v1396, %v1400
    %1404 = vrot.lane.b32.xlu0 %v1402, 32
    %v1405 = vpop.permute.xlu0 %1404
    %v1407 = vadd.f32 %v1397, %v1405
    %v1408 = vtanh.pop %v1407
    %1410 = vrot.lane.b32.xlu0 %v1408, 64
    %v1411 = vpop.permute.xlu0 %1410
    %v1413 = vmul.f32 %v1396, %v1411
    %v1414 = vxor.u32 %v1386, 2147483648
    %v1415 = vmul.f32 %v1414, 1.442695
    %v1416 = vpow.pop %v1415
    %v1417 = vadd.f32 %v1416, 1.0
    %v1418 = vrcp.pop %v1417
    %v1419 = vmul.f32 1.0, %v1418
    %v1420 = vtanh.pop %v1386
    %v1421 = vsel %vm427, %v1420, %v1419
    %v1422 = vmul.f32 %v1421, %v1229
    %1424 = vrot.lane.b32.xlu0 %v1421, 64
    %v1425 = vpop.permute.xlu0 %1424
    %v1427 = vmul.f32 %v1421, %v1425
    %1429 = vrot.lane.b32.xlu0 %v1427, 32
    %v1430 = vpop.permute.xlu0 %1429
    %v1432 = vadd.f32 %v1422, %v1430
    %v1433 = vtanh.pop %v1432
    %1435 = vrot.lane.b32.xlu0 %v1433, 64
    %v1436 = vpop.permute.xlu0 %1435
    %v1438 = vmul.f32 %v1421, %v1436
    %1440 = vrot.lane.b32.xlu0 %v1413, 32
    %v1441 = vpop.permute.xlu0 %1440
    %v1443 = vrot.slane %v316, 2
    %v1445 = vsel %vm428, %v1441, 0
    %1447 = vmatprep.subr.mxu0 0.0
    %1448 = vmatpush1.msra.mxu0 %v417
    %1449 = vmatprep.subr.mxu0 0.0
    %1450 = vmatpush1.msra.mxu0 %v418
    %1451 = vmatprep.subr.mxu0 0.0
    %1452 = vmatpush1.msra.mxu0 %v419
    %1453 = vmatprep.subr.mxu0 0.0
    %1454 = vmatpush1.msra.mxu0 %v420
    %1455 = vmatprep.subr.mxu0 0.0
    %1456 = vmatpush1.msra.mxu0 0.0
    %1457 = vmatprep.subr.mxu0 0.0
    %1458 = vmatpush1.msra.mxu0 0.0
    %1459 = vmatprep.subr.mxu0 0.0
    %1460 = vmatpush1.msra.mxu0 0.0
    %1461 = vmatprep.subr.mxu0 0.0
    %1462 = vmatpush1.msra.mxu0 0.0
    %1463 = vmatprep.subr.mxu0 0.0
    %1464 = vmatpush1.msra.mxu0 0.0
    %1465 = vmatprep.subr.mxu0 0.0
    %1466 = vmatpush1.msra.mxu0 0.0
    %1467 = vmatprep.subr.mxu0 0.0
    %1468 = vmatpush1.msra.mxu0 0.0
    %1469 = vmatprep.subr.mxu0 0.0
    %1470 = vmatpush1.msra.mxu0 0.0
    %1471 = vmatprep.subr.mxu0 0.0
    %1472 = vmatpush1.msra.mxu0 0.0
    %1473 = vmatprep.subr.mxu0 0.0
    %1474 = vmatpush1.msra.mxu0 0.0
    %1475 = vmatprep.subr.mxu0 0.0
    %1476 = vmatpush1.msra.mxu0 0.0
    %1477 = vmatprep.subr.mxu0 0.0
    %1478 = vmatpush1.msra.mxu0 0.0
    %1479 = vmatprep.subr.mxu0 0.0
    %1480 = vmatpush1.msra.mxu0 0.0
    %1481 = vmatprep.subr.mxu0 0.0
    %1482 = vmatpush1.msra.mxu0 0.0
    %1483 = vmatprep.subr.mxu0 0.0
    %1484 = vmatpush1.msra.mxu0 0.0
    %1485 = vmatprep.subr.mxu0 0.0
    %1486 = vmatpush1.msra.mxu0 0.0
    %1487 = vmatprep.subr.mxu0 0.0
    %1488 = vmatpush1.msra.mxu0 0.0
    %1489 = vmatprep.subr.mxu0 0.0
    %1490 = vmatpush1.msra.mxu0 0.0
    %1491 = vmatprep.subr.mxu0 0.0
    %1492 = vmatpush1.msra.mxu0 0.0
    %1493 = vmatprep.subr.mxu0 0.0
    %1494 = vmatpush1.msra.mxu0 0.0
    %1495 = vmatprep.subr.mxu0 0.0
    %1496 = vmatpush1.msra.mxu0 0.0
    %1497 = vmatprep.subr.mxu0 0.0
    %1498 = vmatpush1.msra.mxu0 0.0
    %1499 = vmatprep.subr.mxu0 0.0
    %1500 = vmatpush1.msra.mxu0 0.0
    %1501 = vmatprep.subr.mxu0 0.0
    %1502 = vmatpush1.msra.mxu0 0.0
    %1503 = vmatprep.subr.mxu0 0.0
    %1504 = vmatpush1.msra.mxu0 0.0
    %1505 = vmatprep.subr.mxu0 0.0
    %1506 = vmatpush1.msra.mxu0 0.0
    %1507 = vmatprep.subr.mxu0 0.0
    %1508 = vmatpush1.msra.mxu0 0.0
    %1509 = vmatprep.subr.mxu0 0.0
    %1510 = vmatpush1.msra.mxu0 0.0
    %1511 = vmatprep.mubr.f32.mxu0 0.0
    %1512 = vmatmul.mubr.f32.gmra.mrb[0].mxu0 %v1445
    %v1513 = vpop.f32.mrb[0].mxu0
    %v1514 = vadd.f32 %v1443, %v1513
    %v1515 = vpop.f32.mrb[0].mxu0
    %1516 = vdwg.mxu0
    %1518 = vrot.lane.b32.xlu0 %v1438, 32
    %v1519 = vpop.permute.xlu0 %1518
    %v1520 = vrot.slane %v409, 4
    %v1522 = vsel %vm428, %v1519, 0
    %1524 = vmatprep.subr.mxu0 0.0
    %1525 = vmatpush1.msra.mxu0 %v421
    %1526 = vmatprep.subr.mxu0 0.0
    %1527 = vmatpush1.msra.mxu0 %v422
    %1528 = vmatprep.subr.mxu0 0.0
    %1529 = vmatpush1.msra.mxu0 %v423
    %1530 = vmatprep.subr.mxu0 0.0
    %1531 = vmatpush1.msra.mxu0 %v424
    %1532 = vmatprep.subr.mxu0 0.0
    %1533 = vmatpush1.msra.mxu0 0.0
    %1534 = vmatprep.subr.mxu0 0.0
    %1535 = vmatpush1.msra.mxu0 0.0
    %1536 = vmatprep.subr.mxu0 0.0
    %1537 = vmatpush1.msra.mxu0 0.0
    %1538 = vmatprep.subr.mxu0 0.0
    %1539 = vmatpush1.msra.mxu0 0.0
    %1540 = vmatprep.subr.mxu0 0.0
    %1541 = vmatpush1.msra.mxu0 0.0
    %1542 = vmatprep.subr.mxu0 0.0
    %1543 = vmatpush1.msra.mxu0 0.0
    %1544 = vmatprep.subr.mxu0 0.0
    %1545 = vmatpush1.msra.mxu0 0.0
    %1546 = vmatprep.subr.mxu0 0.0
    %1547 = vmatpush1.msra.mxu0 0.0
    %1548 = vmatprep.subr.mxu0 0.0
    %1549 = vmatpush1.msra.mxu0 0.0
    %1550 = vmatprep.subr.mxu0 0.0
    %1551 = vmatpush1.msra.mxu0 0.0
    %1552 = vmatprep.subr.mxu0 0.0
    %1553 = vmatpush1.msra.mxu0 0.0
    %1554 = vmatprep.subr.mxu0 0.0
    %1555 = vmatpush1.msra.mxu0 0.0
    %1556 = vmatprep.subr.mxu0 0.0
    %1557 = vmatpush1.msra.mxu0 0.0
    %1558 = vmatprep.subr.mxu0 0.0
    %1559 = vmatpush1.msra.mxu0 0.0
    %1560 = vmatprep.subr.mxu0 0.0
    %1561 = vmatpush1.msra.mxu0 0.0
    %1562 = vmatprep.subr.mxu0 0.0
    %1563 = vmatpush1.msra.mxu0 0.0
    %1564 = vmatprep.subr.mxu0 0.0
    %1565 = vmatpush1.msra.mxu0 0.0
    %1566 = vmatprep.subr.mxu0 0.0
    %1567 = vmatpush1.msra.mxu0 0.0
    %1568 = vmatprep.subr.mxu0 0.0
    %1569 = vmatpush1.msra.mxu0 0.0
    %1570 = vmatprep.subr.mxu0 0.0
    %1571 = vmatpush1.msra.mxu0 0.0
    %1572 = vmatprep.subr.mxu0 0.0
    %1573 = vmatpush1.msra.mxu0 0.0
    %1574 = vmatprep.subr.mxu0 0.0
    %1575 = vmatpush1.msra.mxu0 0.0
    %1576 = vmatprep.subr.mxu0 0.0
    %1577 = vmatpush1.msra.mxu0 0.0
    %1578 = vmatprep.subr.mxu0 0.0
    %1579 = vmatpush1.msra.mxu0 0.0
    %1580 = vmatprep.subr.mxu0 0.0
    %1581 = vmatpush1.msra.mxu0 0.0
    %1582 = vmatprep.subr.mxu0 0.0
    %1583 = vmatpush1.msra.mxu0 0.0
    %1584 = vmatprep.subr.mxu0 0.0
    %1585 = vmatpush1.msra.mxu0 0.0
    %1586 = vmatprep.subr.mxu0 0.0
    %1587 = vmatpush1.msra.mxu0 0.0
    %1588 = vmatprep.mubr.f32.mxu0 0.0
    %1589 = vmatmul.mubr.f32.gmra.mrb[0].mxu0 %v1522
    %v1590 = vpop.f32.mrb[0].mxu0
    %v1591 = vadd.f32 %v1520, %v1590
    %v1592 = vpop.f32.mrb[0].mxu0
    %1593 = vdwg.mxu0
    %v1594 = vxor.u32 %v1514, 2147483648
    %v1595 = vmul.f32 %v1594, 1.442695
    %v1596 = vpow.pop %v1595
    %v1597 = vadd.f32 %v1596, 1.0
    %v1598 = vrcp.pop %v1597
    %v1599 = vmul.f32 1.0, %v1598
    %v1600 = vtanh.pop %v1514
    %v1601 = vsel %vm427, %v1600, %v1599
    %v1602 = vmul.f32 %v1601, %v1407
    %1604 = vrot.lane.b32.xlu0 %v1601, 64
    %v1605 = vpop.permute.xlu0 %1604
    %v1607 = vmul.f32 %v1601, %v1605
    %1609 = vrot.lane.b32.xlu0 %v1607, 32
    %v1610 = vpop.permute.xlu0 %1609
    %v1612 = vadd.f32 %v1602, %v1610
    %v1613 = vtanh.pop %v1612
    %1615 = vrot.lane.b32.xlu0 %v1613, 64
    %v1616 = vpop.permute.xlu0 %1615
    %v1618 = vmul.f32 %v1601, %v1616
    %v1619 = vxor.u32 %v1591, 2147483648
    %v1620 = vmul.f32 %v1619, 1.442695
    %v1621 = vpow.pop %v1620
    %v1622 = vadd.f32 %v1621, 1.0
    %v1623 = vrcp.pop %v1622
    %v1624 = vmul.f32 1.0, %v1623
    %v1625 = vtanh.pop %v1591
    %v1626 = vsel %vm427, %v1625, %v1624
    %v1627 = vmul.f32 %v1626, %v1432
    %1629 = vrot.lane.b32.xlu0 %v1626, 64
    %v1630 = vpop.permute.xlu0 %1629
    %v1632 = vmul.f32 %v1626, %v1630
    %1634 = vrot.lane.b32.xlu0 %v1632, 32
    %v1635 = vpop.permute.xlu0 %1634
    %v1637 = vadd.f32 %v1627, %v1635
    %v1638 = vtanh.pop %v1637
    %1640 = vrot.lane.b32.xlu0 %v1638, 64
    %v1641 = vpop.permute.xlu0 %1640
    %v1643 = vmul.f32 %v1626, %v1641
    %1645 = vrot.lane.b32.xlu0 %v1618, 32
    %v1646 = vpop.permute.xlu0 %1645
    %v1647 = vrot.slane %v316, 4
    %v1649 = vsel %vm428, %v1646, 0
    %1651 = vmatprep.subr.mxu0 0.0
    %1652 = vmatpush1.msra.mxu0 %v417
    %1653 = vmatprep.subr.mxu0 0.0
    %1654 = vmatpush1.msra.mxu0 %v418
    %1655 = vmatprep.subr.mxu0 0.0
    %1656 = vmatpush1.msra.mxu0 %v419
    %1657 = vmatprep.subr.mxu0 0.0
    %1658 = vmatpush1.msra.mxu0 %v420
    %1659 = vmatprep.subr.mxu0 0.0
    %1660 = vmatpush1.msra.mxu0 0.0
    %1661 = vmatprep.subr.mxu0 0.0
    %1662 = vmatpush1.msra.mxu0 0.0
    %1663 = vmatprep.subr.mxu0 0.0
    %1664 = vmatpush1.msra.mxu0 0.0
    %1665 = vmatprep.subr.mxu0 0.0
    %1666 = vmatpush1.msra.mxu0 0.0
    %1667 = vmatprep.subr.mxu0 0.0
    %1668 = vmatpush1.msra.mxu0 0.0
    %1669 = vmatprep.subr.mxu0 0.0
    %1670 = vmatpush1.msra.mxu0 0.0
    %1671 = vmatprep.subr.mxu0 0.0
    %1672 = vmatpush1.msra.mxu0 0.0
    %1673 = vmatprep.subr.mxu0 0.0
    %1674 = vmatpush1.msra.mxu0 0.0
    %1675 = vmatprep.subr.mxu0 0.0
    %1676 = vmatpush1.msra.mxu0 0.0
    %1677 = vmatprep.subr.mxu0 0.0
    %1678 = vmatpush1.msra.mxu0 0.0
    %1679 = vmatprep.subr.mxu0 0.0
    %1680 = vmatpush1.msra.mxu0 0.0
    %1681 = vmatprep.subr.mxu0 0.0
    %1682 = vmatpush1.msra.mxu0 0.0
    %1683 = vmatprep.subr.mxu0 0.0
    %1684 = vmatpush1.msra.mxu0 0.0
    %1685 = vmatprep.subr.mxu0 0.0
    %1686 = vmatpush1.msra.mxu0 0.0
    %1687 = vmatprep.subr.mxu0 0.0
    %1688 = vmatpush1.msra.mxu0 0.0
    %1689 = vmatprep.subr.mxu0 0.0
    %1690 = vmatpush1.msra.mxu0 0.0
    %1691 = vmatprep.subr.mxu0 0.0
    %1692 = vmatpush1.msra.mxu0 0.0
    %1693 = vmatprep.subr.mxu0 0.0
    %1694 = vmatpush1.msra.mxu0 0.0
    %1695 = vmatprep.subr.mxu0 0.0
    %1696 = vmatpush1.msra.mxu0 0.0
    %1697 = vmatprep.subr.mxu0 0.0
    %1698 = vmatpush1.msra.mxu0 0.0
    %1699 = vmatprep.subr.mxu0 0.0
    %1700 = vmatpush1.msra.mxu0 0.0
    %1701 = vmatprep.subr.mxu0 0.0
    %1702 = vmatpush1.msra.mxu0 0.0
    %1703 = vmatprep.subr.mxu0 0.0
    %1704 = vmatpush1.msra.mxu0 0.0
    %1705 = vmatprep.subr.mxu0 0.0
    %1706 = vmatpush1.msra.mxu0 0.0
    %1707 = vmatprep.subr.mxu0 0.0
    %1708 = vmatpush1.msra.mxu0 0.0
    %1709 = vmatprep.subr.mxu0 0.0
    %1710 = vmatpush1.msra.mxu0 0.0
    %1711 = vmatprep.subr.mxu0 0.0
    %1712 = vmatpush1.msra.mxu0 0.0
    %1713 = vmatprep.subr.mxu0 0.0
    %1714 = vmatpush1.msra.mxu0 0.0
    %1715 = vmatprep.mubr.f32.mxu0 0.0
    %1716 = vmatmul.mubr.f32.gmra.mrb[0].mxu0 %v1649
    %v1717 = vpop.f32.mrb[0].mxu0
    %v1718 = vadd.f32 %v1647, %v1717
    %v1719 = vpop.f32.mrb[0].mxu0
    %1720 = vdwg.mxu0
    %1722 = vrot.lane.b32.xlu0 %v1643, 32
    %v1723 = vpop.permute.xlu0 %1722
    %v1724 = vrot.slane %v409, 2
    %v1726 = vsel %vm428, %v1723, 0
    %1728 = vmatprep.subr.mxu0 0.0
    %1729 = vmatpush1.msra.mxu0 %v421
    %1730 = vmatprep.subr.mxu0 0.0
    %1731 = vmatpush1.msra.mxu0 %v422
    %1732 = vmatprep.subr.mxu0 0.0
    %1733 = vmatpush1.msra.mxu0 %v423
    %1734 = vmatprep.subr.mxu0 0.0
    %1735 = vmatpush1.msra.mxu0 %v424
    %1736 = vmatprep.subr.mxu0 0.0
    %1737 = vmatpush1.msra.mxu0 0.0
    %1738 = vmatprep.subr.mxu0 0.0
    %1739 = vmatpush1.msra.mxu0 0.0
    %1740 = vmatprep.subr.mxu0 0.0
    %1741 = vmatpush1.msra.mxu0 0.0
    %1742 = vmatprep.subr.mxu0 0.0
    %1743 = vmatpush1.msra.mxu0 0.0
    %1744 = vmatprep.subr.mxu0 0.0
    %1745 = vmatpush1.msra.mxu0 0.0
    %1746 = vmatprep.subr.mxu0 0.0
    %1747 = vmatpush1.msra.mxu0 0.0
    %1748 = vmatprep.subr.mxu0 0.0
    %1749 = vmatpush1.msra.mxu0 0.0
    %1750 = vmatprep.subr.mxu0 0.0
    %1751 = vmatpush1.msra.mxu0 0.0
    %1752 = vmatprep.subr.mxu0 0.0
    %1753 = vmatpush1.msra.mxu0 0.0
    %1754 = vmatprep.subr.mxu0 0.0
    %1755 = vmatpush1.msra.mxu0 0.0
    %1756 = vmatprep.subr.mxu0 0.0
    %1757 = vmatpush1.msra.mxu0 0.0
    %1758 = vmatprep.subr.mxu0 0.0
    %1759 = vmatpush1.msra.mxu0 0.0
    %1760 = vmatprep.subr.mxu0 0.0
    %1761 = vmatpush1.msra.mxu0 0.0
    %1762 = vmatprep.subr.mxu0 0.0
    %1763 = vmatpush1.msra.mxu0 0.0
    %1764 = vmatprep.subr.mxu0 0.0
    %1765 = vmatpush1.msra.mxu0 0.0
    %1766 = vmatprep.subr.mxu0 0.0
    %1767 = vmatpush1.msra.mxu0 0.0
    %1768 = vmatprep.subr.mxu0 0.0
    %1769 = vmatpush1.msra.mxu0 0.0
    %1770 = vmatprep.subr.mxu0 0.0
    %1771 = vmatpush1.msra.mxu0 0.0
    %1772 = vmatprep.subr.mxu0 0.0
    %1773 = vmatpush1.msra.mxu0 0.0
    %1774 = vmatprep.subr.mxu0 0.0
    %1775 = vmatpush1.msra.mxu0 0.0
    %1776 = vmatprep.subr.mxu0 0.0
    %1777 = vmatpush1.msra.mxu0 0.0
    %1778 = vmatprep.subr.mxu0 0.0
    %1779 = vmatpush1.msra.mxu0 0.0
    %1780 = vmatprep.subr.mxu0 0.0
    %1781 = vmatpush1.msra.mxu0 0.0
    %1782 = vmatprep.subr.mxu0 0.0
    %1783 = vmatpush1.msra.mxu0 0.0
    %1784 = vmatprep.subr.mxu0 0.0
    %1785 = vmatpush1.msra.mxu0 0.0
    %1786 = vmatprep.subr.mxu0 0.0
    %1787 = vmatpush1.msra.mxu0 0.0
    %1788 = vmatprep.subr.mxu0 0.0
    %1789 = vmatpush1.msra.mxu0 0.0
    %1790 = vmatprep.subr.mxu0 0.0
    %1791 = vmatpush1.msra.mxu0 0.0
    %1792 = vmatprep.mubr.f32.mxu0 0.0
    %1793 = vmatmul.mubr.f32.gmra.mrb[0].mxu0 %v1726
    %v1794 = vpop.f32.mrb[0].mxu0
    %v1795 = vadd.f32 %v1724, %v1794
    %v1796 = vpop.f32.mrb[0].mxu0
    %1797 = vdwg.mxu0
    %v1798 = vxor.u32 %v1718, 2147483648
    %v1799 = vmul.f32 %v1798, 1.442695
    %v1800 = vpow.pop %v1799
    %v1801 = vadd.f32 %v1800, 1.0
    %v1802 = vrcp.pop %v1801
    %v1803 = vmul.f32 1.0, %v1802
    %v1804 = vtanh.pop %v1718
    %v1805 = vsel %vm427, %v1804, %v1803
    %v1806 = vmul.f32 %v1805, %v1612
    %1808 = vrot.lane.b32.xlu0 %v1805, 64
    %v1809 = vpop.permute.xlu0 %1808
    %v1811 = vmul.f32 %v1805, %v1809
    %1813 = vrot.lane.b32.xlu0 %v1811, 32
    %v1814 = vpop.permute.xlu0 %1813
    %v1816 = vadd.f32 %v1806, %v1814
    %v1817 = vtanh.pop %v1816
    %1819 = vrot.lane.b32.xlu0 %v1817, 64
    %v1820 = vpop.permute.xlu0 %1819
    %v1822 = vmul.f32 %v1805, %v1820
    %v1823 = vxor.u32 %v1795, 2147483648
    %v1824 = vmul.f32 %v1823, 1.442695
    %v1825 = vpow.pop %v1824
    %v1826 = vadd.f32 %v1825, 1.0
    %v1827 = vrcp.pop %v1826
    %v1828 = vmul.f32 1.0, %v1827
    %v1829 = vtanh.pop %v1795
    %v1830 = vsel %vm427, %v1829, %v1828
    %v1831 = vmul.f32 %v1830, %v1637
    %1833 = vrot.lane.b32.xlu0 %v1830, 64
    %v1834 = vpop.permute.xlu0 %1833
    %v1836 = vmul.f32 %v1830, %v1834
    %1838 = vrot.lane.b32.xlu0 %v1836, 32
    %v1839 = vpop.permute.xlu0 %1838
    %v1841 = vadd.f32 %v1831, %v1839
    %v1842 = vtanh.pop %v1841
    %1844 = vrot.lane.b32.xlu0 %v1842, 64
    %v1845 = vpop.permute.xlu0 %1844
    %v1847 = vmul.f32 %v1830, %v1845
    %1849 = vrot.lane.b32.xlu0 %v1822, 32
    %v1850 = vpop.permute.xlu0 %1849
    %v1851 = vrot.slane %v316, 6
    %v1853 = vsel %vm428, %v1850, 0
    %1855 = vmatprep.subr.mxu0 0.0
    %1856 = vmatpush1.msra.mxu0 %v417
    %1857 = vmatprep.subr.mxu0 0.0
    %1858 = vmatpush1.msra.mxu0 %v418
    %1859 = vmatprep.subr.mxu0 0.0
    %1860 = vmatpush1.msra.mxu0 %v419
    %1861 = vmatprep.subr.mxu0 0.0
    %1862 = vmatpush1.msra.mxu0 %v420
    %1863 = vmatprep.subr.mxu0 0.0
    %1864 = vmatpush1.msra.mxu0 0.0
    %1865 = vmatprep.subr.mxu0 0.0
    %1866 = vmatpush1.msra.mxu0 0.0
    %1867 = vmatprep.subr.mxu0 0.0
    %1868 = vmatpush1.msra.mxu0 0.0
    %1869 = vmatprep.subr.mxu0 0.0
    %1870 = vmatpush1.msra.mxu0 0.0
    %1871 = vmatprep.subr.mxu0 0.0
    %1872 = vmatpush1.msra.mxu0 0.0
    %1873 = vmatprep.subr.mxu0 0.0
    %1874 = vmatpush1.msra.mxu0 0.0
    %1875 = vmatprep.subr.mxu0 0.0
    %1876 = vmatpush1.msra.mxu0 0.0
    %1877 = vmatprep.subr.mxu0 0.0
    %1878 = vmatpush1.msra.mxu0 0.0
    %1879 = vmatprep.subr.mxu0 0.0
    %1880 = vmatpush1.msra.mxu0 0.0
    %1881 = vmatprep.subr.mxu0 0.0
    %1882 = vmatpush1.msra.mxu0 0.0
    %1883 = vmatprep.subr.mxu0 0.0
    %1884 = vmatpush1.msra.mxu0 0.0
    %1885 = vmatprep.subr.mxu0 0.0
    %1886 = vmatpush1.msra.mxu0 0.0
    %1887 = vmatprep.subr.mxu0 0.0
    %1888 = vmatpush1.msra.mxu0 0.0
    %1889 = vmatprep.subr.mxu0 0.0
    %1890 = vmatpush1.msra.mxu0 0.0
    %1891 = vmatprep.subr.mxu0 0.0
    %1892 = vmatpush1.msra.mxu0 0.0
    %1893 = vmatprep.subr.mxu0 0.0
    %1894 = vmatpush1.msra.mxu0 0.0
    %1895 = vmatprep.subr.mxu0 0.0
    %1896 = vmatpush1.msra.mxu0 0.0
    %1897 = vmatprep.subr.mxu0 0.0
    %1898 = vmatpush1.msra.mxu0 0.0
    %1899 = vmatprep.subr.mxu0 0.0
    %1900 = vmatpush1.msra.mxu0 0.0
    %1901 = vmatprep.subr.mxu0 0.0
    %1902 = vmatpush1.msra.mxu0 0.0
    %1903 = vmatprep.subr.mxu0 0.0
    %1904 = vmatpush1.msra.mxu0 0.0
    %1905 = vmatprep.subr.mxu0 0.0
    %1906 = vmatpush1.msra.mxu0 0.0
    %1907 = vmatprep.subr.mxu0 0.0
    %1908 = vmatpush1.msra.mxu0 0.0
    %1909 = vmatprep.subr.mxu0 0.0
    %1910 = vmatpush1.msra.mxu0 0.0
    %1911 = vmatprep.subr.mxu0 0.0
    %1912 = vmatpush1.msra.mxu0 0.0
    %1913 = vmatprep.subr.mxu0 0.0
    %1914 = vmatpush1.msra.mxu0 0.0
    %1915 = vmatprep.subr.mxu0 0.0
    %1916 = vmatpush1.msra.mxu0 0.0
    %1917 = vmatprep.subr.mxu0 0.0
    %1918 = vmatpush1.msra.mxu0 0.0
    %1919 = vmatprep.mubr.f32.mxu0 0.0
    %1920 = vmatmul.mubr.f32.gmra.mrb[0].mxu0 %v1853
    %v1921 = vpop.f32.mrb[0].mxu0
    %v1922 = vadd.f32 %v1851, %v1921
    %v1923 = vpop.f32.mrb[0].mxu0
    %1924 = vdwg.mxu0
    %1926 = vrot.lane.b32.xlu0 %v1847, 32
    %v1927 = vpop.permute.xlu0 %1926
    %v1928 = vsel %vm428, %v1927, 0
    %1930 = vmatprep.subr.mxu0 0.0
    %1931 = vmatpush1.msra.mxu0 %v421
    %1932 = vmatprep.subr.mxu0 0.0
    %1933 = vmatpush1.msra.mxu0 %v422
    %1934 = vmatprep.subr.mxu0 0.0
    %1935 = vmatpush1.msra.mxu0 %v423
    %1936 = vmatprep.subr.mxu0 0.0
    %1937 = vmatpush1.msra.mxu0 %v424
    %1938 = vmatprep.subr.mxu0 0.0
    %1939 = vmatpush1.msra.mxu0 0.0
    %1940 = vmatprep.subr.mxu0 0.0
    %1941 = vmatpush1.msra.mxu0 0.0
    %1942 = vmatprep.subr.mxu0 0.0
    %1943 = vmatpush1.msra.mxu0 0.0
    %1944 = vmatprep.subr.mxu0 0.0
    %1945 = vmatpush1.msra.mxu0 0.0
    %1946 = vmatprep.subr.mxu0 0.0
    %1947 = vmatpush1.msra.mxu0 0.0
    %1948 = vmatprep.subr.mxu0 0.0
    %1949 = vmatpush1.msra.mxu0 0.0
    %1950 = vmatprep.subr.mxu0 0.0
    %1951 = vmatpush1.msra.mxu0 0.0
    %1952 = vmatprep.subr.mxu0 0.0
    %1953 = vmatpush1.msra.mxu0 0.0
    %1954 = vmatprep.subr.mxu0 0.0
    %1955 = vmatpush1.msra.mxu0 0.0
    %1956 = vmatprep.subr.mxu0 0.0
    %1957 = vmatpush1.msra.mxu0 0.0
    %1958 = vmatprep.subr.mxu0 0.0
    %1959 = vmatpush1.msra.mxu0 0.0
    %1960 = vmatprep.subr.mxu0 0.0
    %1961 = vmatpush1.msra.mxu0 0.0
    %1962 = vmatprep.subr.mxu0 0.0
    %1963 = vmatpush1.msra.mxu0 0.0
    %1964 = vmatprep.subr.mxu0 0.0
    %1965 = vmatpush1.msra.mxu0 0.0
    %1966 = vmatprep.subr.mxu0 0.0
    %1967 = vmatpush1.msra.mxu0 0.0
    %1968 = vmatprep.subr.mxu0 0.0
    %1969 = vmatpush1.msra.mxu0 0.0
    %1970 = vmatprep.subr.mxu0 0.0
    %1971 = vmatpush1.msra.mxu0 0.0
    %1972 = vmatprep.subr.mxu0 0.0
    %1973 = vmatpush1.msra.mxu0 0.0
    %1974 = vmatprep.subr.mxu0 0.0
    %1975 = vmatpush1.msra.mxu0 0.0
    %1976 = vmatprep.subr.mxu0 0.0
    %1977 = vmatpush1.msra.mxu0 0.0
    %1978 = vmatprep.subr.mxu0 0.0
    %1979 = vmatpush1.msra.mxu0 0.0
    %1980 = vmatprep.subr.mxu0 0.0
    %1981 = vmatpush1.msra.mxu0 0.0
    %1982 = vmatprep.subr.mxu0 0.0
    %1983 = vmatpush1.msra.mxu0 0.0
    %1984 = vmatprep.subr.mxu0 0.0
    %1985 = vmatpush1.msra.mxu0 0.0
    %1986 = vmatprep.subr.mxu0 0.0
    %1987 = vmatpush1.msra.mxu0 0.0
    %1988 = vmatprep.subr.mxu0 0.0
    %1989 = vmatpush1.msra.mxu0 0.0
    %1990 = vmatprep.subr.mxu0 0.0
    %1991 = vmatpush1.msra.mxu0 0.0
    %1992 = vmatprep.subr.mxu0 0.0
    %1993 = vmatpush1.msra.mxu0 0.0
    %1994 = vmatprep.mubr.f32.mxu0 0.0
    %1995 = vmatmul.mubr.f32.gmra.mrb[0].mxu0 %v1928
    %v1996 = vpop.f32.mrb[0].mxu0
    %v1997 = vadd.f32 %v409, %v1996
    %v1998 = vpop.f32.mrb[0].mxu0
    %1999 = vdwg.mxu0
    %v2000 = vxor.u32 %v1922, 2147483648
    %v2001 = vmul.f32 %v2000, 1.442695
    %v2002 = vpow.pop %v2001
    %v2003 = vadd.f32 %v2002, 1.0
    %v2004 = vrcp.pop %v2003
    %v2005 = vmul.f32 1.0, %v2004
    %v2006 = vtanh.pop %v1922
    %v2007 = vsel %vm427, %v2006, %v2005
    %v2008 = vmul.f32 %v2007, %v1816
    %2010 = vrot.lane.b32.xlu0 %v2007, 64
    %v2011 = vpop.permute.xlu0 %2010
    %v2013 = vmul.f32 %v2007, %v2011
    %2015 = vrot.lane.b32.xlu0 %v2013, 32
    %v2016 = vpop.permute.xlu0 %2015
    %v2018 = vadd.f32 %v2008, %v2016
    %v2019 = vtanh.pop %v2018
    %2021 = vrot.lane.b32.xlu0 %v2019, 64
    %v2022 = vpop.permute.xlu0 %2021
    %v2024 = vmul.f32 %v2007, %v2022
    %v2025 = vxor.u32 %v1997, 2147483648
    %v2026 = vmul.f32 %v2025, 1.442695
    %v2027 = vpow.pop %v2026
    %v2028 = vadd.f32 %v2027, 1.0
    %v2029 = vrcp.pop %v2028
    %v2030 = vmul.f32 1.0, %v2029
    %v2031 = vtanh.pop %v1997
    %v2032 = vsel %vm427, %v2031, %v2030
    %v2033 = vmul.f32 %v2032, %v1841
    %2035 = vrot.lane.b32.xlu0 %v2032, 64
    %v2036 = vpop.permute.xlu0 %2035
    %v2038 = vmul.f32 %v2032, %v2036
    %2040 = vrot.lane.b32.xlu0 %v2038, 32
    %v2041 = vpop.permute.xlu0 %2040
    %v2043 = vadd.f32 %v2033, %v2041
    %v2044 = vtanh.pop %v2043
    %2046 = vrot.lane.b32.xlu0 %v2044, 64
    %v2047 = vpop.permute.xlu0 %2046
    %v2049 = vmul.f32 %v2032, %v2047
    %2051 = vrot.lane.b32.xlu0 %v2024, 32
    %v2052 = vpop.permute.xlu0 %2051
    %2055 = vrot.lane.b32.xlu0 %v2049, 64
    %v2056 = vpop.permute.xlu0 %2055
    %v2058 = vsel %vm428, %v2052, %v2056
    %v2059 = vld [vmem:[%s8] sm:$0xff]
    %v2060 = vld [vmem:[%s8 + $0x8] sm:$0xff]
    %v2061 = vld [vmem:[%s8 + $0x10] sm:$0xff]
    %v2062 = vld [vmem:[%s8 + $0x18] sm:$0xff]
    %v2063 = vld [vmem:[%s8 + $0x20] sm:$0xff]
    %v2064 = vld [vmem:[%s8 + $0x28] sm:$0xff]
    %v2065 = vld [vmem:[%s8 + $0x30] sm:$0xff]
    %v2066 = vld [vmem:[%s8 + $0x38] sm:$0xff]
    %v2067 = vld [vmem:[#allocation8] sm:$0x1]
    %v2069 = vlaneseq
    %v2070 = vshrl.u32 %v2069, 7
    %v2071 = vsub.s32 0, %v2070
    %v2072 = vrot.slane %v2067, %v2071
    %vm2074 = vcmask 523264
    %v2076 = vsel %vm2074, %v2058, 0
    %2078 = vmatprep.subr.mxu0 0.0
    %2079 = vmatpush1.msra.mxu0 %v2059
    %2080 = vmatprep.subr.mxu0 0.0
    %2081 = vmatpush1.msra.mxu0 %v2060
    %2082 = vmatprep.subr.mxu0 0.0
    %2083 = vmatpush1.msra.mxu0 %v2061
    %2084 = vmatprep.subr.mxu0 0.0
    %2085 = vmatpush1.msra.mxu0 %v2062
    %2086 = vmatprep.subr.mxu0 0.0
    %2087 = vmatpush1.msra.mxu0 %v2063
    %2088 = vmatprep.subr.mxu0 0.0
    %2089 = vmatpush1.msra.mxu0 %v2064
    %2090 = vmatprep.subr.mxu0 0.0
    %2091 = vmatpush1.msra.mxu0 %v2065
    %2092 = vmatprep.subr.mxu0 0.0
    %2093 = vmatpush1.msra.mxu0 %v2066
    %2094 = vmatprep.subr.mxu0 0.0
    %2095 = vmatpush1.msra.mxu0 0.0
    %2096 = vmatprep.subr.mxu0 0.0
    %2097 = vmatpush1.msra.mxu0 0.0
    %2098 = vmatprep.subr.mxu0 0.0
    %2099 = vmatpush1.msra.mxu0 0.0
    %2100 = vmatprep.subr.mxu0 0.0
    %2101 = vmatpush1.msra.mxu0 0.0
    %2102 = vmatprep.subr.mxu0 0.0
    %2103 = vmatpush1.msra.mxu0 0.0
    %2104 = vmatprep.subr.mxu0 0.0
    %2105 = vmatpush1.msra.mxu0 0.0
    %2106 = vmatprep.subr.mxu0 0.0
    %2107 = vmatpush1.msra.mxu0 0.0
    %2108 = vmatprep.subr.mxu0 0.0
    %2109 = vmatpush1.msra.mxu0 0.0
    %2110 = vmatprep.subr.mxu0 0.0
    %2111 = vmatpush1.msra.mxu0 0.0
    %2112 = vmatprep.subr.mxu0 0.0
    %2113 = vmatpush1.msra.mxu0 0.0
    %2114 = vmatprep.subr.mxu0 0.0
    %2115 = vmatpush1.msra.mxu0 0.0
    %2116 = vmatprep.subr.mxu0 0.0
    %2117 = vmatpush1.msra.mxu0 0.0
    %2118 = vmatprep.subr.mxu0 0.0
    %2119 = vmatpush1.msra.mxu0 0.0
    %2120 = vmatprep.subr.mxu0 0.0
    %2121 = vmatpush1.msra.mxu0 0.0
    %2122 = vmatprep.subr.mxu0 0.0
    %2123 = vmatpush1.msra.mxu0 0.0
    %2124 = vmatprep.subr.mxu0 0.0
    %2125 = vmatpush1.msra.mxu0 0.0
    %2126 = vmatprep.subr.mxu0 0.0
    %2127 = vmatpush1.msra.mxu0 0.0
    %2128 = vmatprep.subr.mxu0 0.0
    %2129 = vmatpush1.msra.mxu0 0.0
    %2130 = vmatprep.subr.mxu0 0.0
    %2131 = vmatpush1.msra.mxu0 0.0
    %2132 = vmatprep.subr.mxu0 0.0
    %2133 = vmatpush1.msra.mxu0 0.0
    %2134 = vmatprep.subr.mxu0 0.0
    %2135 = vmatpush1.msra.mxu0 0.0
    %2136 = vmatprep.subr.mxu0 0.0
    %2137 = vmatpush1.msra.mxu0 0.0
    %2138 = vmatprep.subr.mxu0 0.0
    %2139 = vmatpush1.msra.mxu0 0.0
    %2140 = vmatprep.subr.mxu0 0.0
    %2141 = vmatpush1.msra.mxu0 0.0
    %2142 = vmatprep.mubr.f32.mxu0 0.0
    %2143 = vmatmul.mubr.f32.gmra.mrb[0].mxu0 %v2076
    %v2144 = vpop.f32.mrb[0].mxu0
    %v2145 = vadd.f32 %v2072, %v2144
    %v2146 = vpop.f32.mrb[0].mxu0
    %2147 = vdwg.mxu0
    %v2148 = vmax.f32 %v2145, 0.0
    %v2149 = vld [vmem:[%s10] sm:$0xff]
    %v2150 = vld [vmem:[%s10 + $0x8] sm:$0xff]
    %v2151 = vld [vmem:[%s10 + $0x10] sm:$0xf]
    %v2152 = vld [vmem:[#allocation10] sm:$0x1]
    %v2154 = vlaneseq
    %v2155 = vshrl.u32 %v2154, 7
    %v2156 = vsub.s32 0, %v2155
    %v2157 = vrot.slane %v2152, %v2156
    %vm2159 = vcmask 162816
    %v2161 = vsel %vm2159, %v2148, 0
    %v2164 = vsel %vm240, %v2151, 0
    %2166 = vmatprep.subr.mxu0 0.0
    %2167 = vmatpush1.msra.mxu0 %v2149
    %2168 = vmatprep.subr.mxu0 0.0
    %2169 = vmatpush1.msra.mxu0 %v2150
    %2170 = vmatprep.subr.mxu0 0.0
    %2171 = vmatpush1.msra.mxu0 %v2164
    %2172 = vmatprep.subr.mxu0 0.0
    %2173 = vmatpush1.msra.mxu0 0.0
    %2174 = vmatprep.subr.mxu0 0.0
    %2175 = vmatpush1.msra.mxu0 0.0
    %2176 = vmatprep.subr.mxu0 0.0
    %2177 = vmatpush1.msra.mxu0 0.0
    %2178 = vmatprep.subr.mxu0 0.0
    %2179 = vmatpush1.msra.mxu0 0.0
    %2180 = vmatprep.subr.mxu0 0.0
    %2181 = vmatpush1.msra.mxu0 0.0
    %2182 = vmatprep.subr.mxu0 0.0
    %2183 = vmatpush1.msra.mxu0 0.0
    %2184 = vmatprep.subr.mxu0 0.0
    %2185 = vmatpush1.msra.mxu0 0.0
    %2186 = vmatprep.subr.mxu0 0.0
    %2187 = vmatpush1.msra.mxu0 0.0
    %2188 = vmatprep.subr.mxu0 0.0
    %2189 = vmatpush1.msra.mxu0 0.0
    %2190 = vmatprep.subr.mxu0 0.0
    %2191 = vmatpush1.msra.mxu0 0.0
    %2192 = vmatprep.subr.mxu0 0.0
    %2193 = vmatpush1.msra.mxu0 0.0
    %2194 = vmatprep.subr.mxu0 0.0
    %2195 = vmatpush1.msra.mxu0 0.0
    %2196 = vmatprep.subr.mxu0 0.0
    %2197 = vmatpush1.msra.mxu0 0.0
    %2198 = vmatprep.subr.mxu0 0.0
    %2199 = vmatpush1.msra.mxu0 0.0
    %2200 = vmatprep.subr.mxu0 0.0
    %2201 = vmatpush1.msra.mxu0 0.0
    %2202 = vmatprep.subr.mxu0 0.0
    %2203 = vmatpush1.msra.mxu0 0.0
    %2204 = vmatprep.subr.mxu0 0.0
    %2205 = vmatpush1.msra.mxu0 0.0
    %2206 = vmatprep.subr.mxu0 0.0
    %2207 = vmatpush1.msra.mxu0 0.0
    %2208 = vmatprep.subr.mxu0 0.0
    %2209 = vmatpush1.msra.mxu0 0.0
    %2210 = vmatprep.subr.mxu0 0.0
    %2211 = vmatpush1.msra.mxu0 0.0
    %2212 = vmatprep.subr.mxu0 0.0
    %2213 = vmatpush1.msra.mxu0 0.0
    %2214 = vmatprep.subr.mxu0 0.0
    %2215 = vmatpush1.msra.mxu0 0.0
    %2216 = vmatprep.subr.mxu0 0.0
    %2217 = vmatpush1.msra.mxu0 0.0
    %2218 = vmatprep.subr.mxu0 0.0
    %2219 = vmatpush1.msra.mxu0 0.0
    %2220 = vmatprep.subr.mxu0 0.0
    %2221 = vmatpush1.msra.mxu0 0.0
    %2222 = vmatprep.subr.mxu0 0.0
    %2223 = vmatpush1.msra.mxu0 0.0
    %2224 = vmatprep.subr.mxu0 0.0
    %2225 = vmatpush1.msra.mxu0 0.0
    %2226 = vmatprep.subr.mxu0 0.0
    %2227 = vmatpush1.msra.mxu0 0.0
    %2228 = vmatprep.subr.mxu0 0.0
    %2229 = vmatpush1.msra.mxu0 0.0
    %2230 = vmatprep.mubr.f32.mxu0 0.0
    %2231 = vmatmul.mubr.f32.gmra.mrb[0].mxu0 %v2161
    %v2232 = vpop.f32.mrb[0].mxu0
    %v2233 = vadd.f32 %v2157, %v2232
    %v2234 = vpop.f32.mrb[0].mxu0
    %2235 = vdwg.mxu0
    %vm2236 = vcmask 9216
    %v2237 = vsel %vm2236, %v2233, -inf
    %2238 = vmax.xlane.f32.xlu0 %v2237
    %v2239 = vpop.xlane.xlu0 %2238
    %v2240 = vsub.f32 %v2233, %v2239
    %v2241 = vmul.f32 %v2240, 1.442695
    %v2242 = vpow.pop %v2241
    %v2243 = vsel %vm2236, %v2242, 0.0
    %2244 = vadd.xlane.f32.xlu0 %v2243
    %v2245 = vpop.xlane.xlu0 %2244
    %v2246 = vlog2.pop %v2245
    %v2247 = vmul.f32 %v2246, 0.6931472
    %v2248 = vsub.f32 %v2240, %v2247
    %2249 = vst.msk [vmem:[#allocation11] sm:$0x3] %vm2236, %v2248
    // Predicated region
    $region70: #{_forward_impl.1} parent=1 // pred_check
      _
    $region71: #{_forward_impl.1} parent=1 // pred_check_branch
      %2251 = sbr.rel (0) target = $region73
    $region72: #{_forward_impl.1} parent=1 // pred_region
      %s2253 = ssub.s32 32, 32
      %2254 = vsyncadd [#allocation4], %s2253
      %s2256 = sshll.u32 [#allocation11], 4
      %s2257 = int_to_ptr.vmem [resolvable:$true] %s2256
      %2259 = dma.vmem_to_hbm [thread:$0]  %s2257, 32, %s12, [#allocation4]
    $region73: #{_forward_impl.1} parent=1 // pred_fallthru
      _
    // Predicated region
    $region74: #{_forward_impl.1} parent=1 // pred_check
      _
    $region75: #{_forward_impl.1} parent=1 // pred_check_branch
      %2261 = sbr.rel (0) target = $region77
    $region76: #{_forward_impl.1} parent=1 // pred_region
      %2262 = dma.done [#allocation4], 32
    $region77: #{_forward_impl.1} parent=1 // pred_fallthru
      _
    %2263 = vsyncpa [#allocation3], 1
    %2264 = vsyncpa [#allocation6], 1
    %2265 = vsyncpa [#allocation9], 1
    %2266 = vsyncpa [#allocation4], 1

</llo_original>
